<compile_context>
chip_gen: v7x
topology: tpu7x:2x2x1
jax: 0.10.0
libtpu: 0.0.40
codegen_flags: <defaults>
</compile_context>

<pallas_src>
import functools

import jax
import jax.numpy as jnp
from jax.experimental import pallas as pl
from jax.experimental.pallas import tpu as pltpu


def _sepconv_kernel(x_ref, wd_ref, wp_ref, b_ref, o_ref, pad_ref, *,
                    k, pad, bt, h_in, w_in, h_out, w_out, use_mxu):
    """Fused depthwise(kxk, groups=C, no bias) + pointwise(1x1, bias) conv.

    x_ref  : (bt, C, H, W)        native NCHW activation block
    wd_ref : (C, k*k)             depthwise weights, channel-major
    wp_ref : (Cout, C)            pointwise weights (native torch layout)
    b_ref  : (Cout, 1)            pointwise bias
    o_ref  : (bt, Cout, H*W) if use_mxu else (bt, Cout, H, W)
    pad_ref: (C, H+2p, W+2p)      VMEM scratch holding the zero-padded image
    """
    c = x_ref.shape[1]
    c_out = wp_ref.shape[0]

    wd = wd_ref[...].astype(jnp.float32)          # (C, k*k)
    wp = wp_ref[...].astype(jnp.float32)          # (Cout, C)
    bias = b_ref[...].astype(jnp.float32)         # (Cout, 1)

    # Zero the padded scratch once per grid step.  Only the border strictly
    # needs it, but a full VMEM clear is cheap and stays correct when the
    # batch grid axis is split across TensorCores (scratch is per-core).
    pad_ref[...] = jnp.zeros_like(pad_ref)

    for bi in range(bt):                          # static unroll over images
        # ---- fused zero padding (no wrapper transpose / pad HBM passes) ----
        x_i = x_ref[bi]                           # (C, H, W)
        if pad > 0:
            zcol = jnp.zeros((c, h_in, pad), x_i.dtype)
            x_i = jnp.concatenate([zcol, x_i, zcol], axis=2)   # lane padding
        # Row (sublane) padding comes from the pre-zeroed scratch border.
        pad_ref[:, pad:pad + h_in, :] = x_i

        if use_mxu:
            # Depthwise: k*k shifted VMEM loads, per-channel scale, f32 acc,
            # accumulator initialised with the first tap's product.
            acc = None
            for dy in range(k):
                for dx in range(k):
                    tap = pad_ref[:, dy:dy + h_out, dx:dx + w_out]
                    w_t = wd[:, dy * k + dx].reshape(c, 1, 1)
                    term = tap.astype(jnp.float32) * w_t
                    acc = term if acc is None else acc + term
            # (C, h, w) -> (C, h*w): channel (contraction) dim stays on
            # sublanes -> no hidden transpose feeding the MXU.
            dw_flat = acc.reshape(c, h_out * w_out)
            out = jax.lax.dot_general(
                wp, dw_flat, dimension_numbers=(((1,), (0,)), ((), ())),
                preferred_element_type=jnp.float32)            # (Cout, HW)
            out = out + bias                      # (Cout, 1) over lanes
            o_ref[bi] = out.astype(o_ref.dtype)   # lane-dense store
        else:
            # Small-channel path: scalar x (H, W)-plane VPU FMAs only; skips
            # the MXU and needs no value reshapes / relayouts.
            dw_planes = []
            for ci in range(c):
                acc = None
                for dy in range(k):
                    for dx in range(k):
                        tap = pad_ref[ci, dy:dy + h_out, dx:dx + w_out]
                        t = dy * k + dx
                        term = tap.astype(jnp.float32) * wd[ci:ci + 1, t:t + 1]
                        acc = term if acc is None else acc + term
                dw_planes.append(acc)             # (h_out, w_out) f32
            for oi in range(c_out):
                out = None
                for ci in range(c):
                    term = dw_planes[ci] * wp[oi:oi + 1, ci:ci + 1]
                    out = term if out is None else out + term
                out = out + bias[oi:oi + 1, :]
                o_ref[bi, oi] = out.astype(o_ref.dtype)


def separable_conv2d(x, w_dw, w_pw, b_pw, *, padding=1):
    """x: (B, C, H, W); w_dw: (C, 1, k, k); w_pw: (Cout, C, 1, 1); b_pw: (Cout,)."""
    B, C, H, W = x.shape
    assert w_dw.shape[0] == C and w_dw.shape[1] == 1
    k = w_dw.shape[2]
    assert w_dw.shape[3] == k
    Cout = w_pw.shape[0]
    assert w_pw.shape[1] == C

    h_pad, w_pad = H + 2 * padding, W + 2 * padding
    h_out, w_out = h_pad - k + 1, w_pad - k + 1

    # Tiny weight reshapes only; the activation is passed through untouched.
    wd = w_dw.reshape(C, k * k)
    wp = w_pw.reshape(Cout, C)
    b2 = b_pw.reshape(Cout, 1)

    # For small channel counts the pointwise 1x1 is a handful of VPU FMAs --
    # a (Cout x C) x (C x HW) MXU matmul would be pure pipeline overhead.
    use_mxu = (C > 16) or (Cout > 16)

    # Batch-block size: as many images per grid step as comfortably fit in a
    # modest VMEM budget (amortises per-grid-step overhead for small images).
    itemsize = jnp.dtype(x.dtype).itemsize
    per_image = (2 * C * H * W * itemsize                # double-buffered input
                 + C * h_pad * w_pad * itemsize           # padded scratch
                 + (C + Cout) * h_out * w_out * 4         # f32 intermediates
                 + 2 * Cout * h_out * w_out * itemsize)   # double-buffered output
    budget = 8 * 1024 * 1024
    max_bt = max(1, budget // max(per_image, 1))
    bt = 1
    for cand in range(int(min(B, max_bt)), 0, -1):
        if B % cand == 0:
            bt = cand
            break

    # TODO(synk): add spatial (halo) tiling over H for images whose padded
    # per-image working set does not fit in VMEM (needed for very large H*W*C,
    # especially on v7x's 64 MiB VMEM).

    kernel = functools.partial(
        _sepconv_kernel, k=k, pad=padding, bt=bt, h_in=H, w_in=W,
        h_out=h_out, w_out=w_out, use_mxu=use_mxu)

    if use_mxu:
        out_shape = jax.ShapeDtypeStruct((B, Cout, h_out * w_out), x.dtype)
        out_spec = pl.BlockSpec((bt, Cout, h_out * w_out), lambda g: (g, 0, 0))
    else:
        out_shape = jax.ShapeDtypeStruct((B, Cout, h_out, w_out), x.dtype)
        out_spec = pl.BlockSpec((bt, Cout, h_out, w_out), lambda g: (g, 0, 0, 0))

    out = pl.pallas_call(
        kernel,
        out_shape=out_shape,
        grid_spec=pltpu.PrefetchScalarGridSpec(
            num_scalar_prefetch=0,
            grid=(B // bt,),
            in_specs=[
                pl.BlockSpec((bt, C, H, W), lambda g: (g, 0, 0, 0)),
                pl.BlockSpec((C, k * k), lambda g: (0, 0)),
                pl.BlockSpec((Cout, C), lambda g: (0, 0)),
                pl.BlockSpec((Cout, 1), lambda g: (0, 0)),
            ],
            out_specs=out_spec,
            scratch_shapes=[pltpu.VMEM((C, h_pad, w_pad), x.dtype)],
        ),
        compiler_params=pltpu.CompilerParams(
            dimension_semantics=("parallel",),
            vmem_limit_bytes=64 * 1024 * 1024),
    )(x, wd, wp, b2)

    if use_mxu:
        out = out.reshape(B, Cout, h_out, w_out)   # free metadata reshape
    return out


def separable_conv2d_ref(x, w_dw, w_pw, b_pw, *, padding=1):
    C = x.shape[1]
    dw = jax.lax.conv_general_dilated(
        x, w_dw, window_strides=(1, 1),
        padding=[(padding, padding), (padding, padding)],
        dimension_numbers=("NCHW", "OIHW", "NCHW"),
        feature_group_count=C)
    pw = jax.lax.conv_general_dilated(
        dw, w_pw, window_strides=(1, 1), padding=[(0, 0), (0, 0)],
        dimension_numbers=("NCHW", "OIHW", "NCHW"))
    return pw + b_pw.reshape(1, -1, 1, 1)


if __name__ == "__main__":
    # Small shapes consistent with the module: NCHW input, kernel_size=3, padding=1.
    B, C, H, W = 2, 4, 16, 16
    Cout, k = 8, 3

    key = jax.random.PRNGKey(0)
    kx, kd, kp, kb = jax.random.split(key, 4)
    x = jax.random.normal(kx, (B, C, H, W), jnp.float32)
    w_dw = jax.random.normal(kd, (C, 1, k, k), jnp.float32) * 0.2
    w_pw = jax.random.normal(kp, (Cout, C, 1, 1), jnp.float32) * 0.2
    b_pw = jax.random.normal(kb, (Cout,), jnp.float32) * 0.1

    out = jax.block_until_ready(separable_conv2d(x, w_dw, w_pw, b_pw))
    ref = separable_conv2d_ref(x, w_dw, w_pw, b_pw)

    assert out.shape == (B, Cout, H, W), out.shape
    assert jnp.allclose(out, ref, atol=1e-4, rtol=1e-4), \
        f"max err {jnp.max(jnp.abs(out - ref))}"

    print("KERNEL_OK")
</pallas_src>

<mosaic_0001>
module attributes {stable_mosaic.version = 11 : i64} {
  func.func @_sepconv_kernel(%arg0: i32, %arg1: memref<2x4x16x16xf32, #tpu.memory_space<vmem>>, %arg2: memref<4x9xf32, #tpu.memory_space<vmem>>, %arg3: memref<8x4xf32, #tpu.memory_space<vmem>>, %arg4: memref<8x1xf32, #tpu.memory_space<vmem>>, %arg5: memref<2x8x16x16xf32, #tpu.memory_space<vmem>>, %arg6: memref<4x18x18xf32, #tpu.memory_space<vmem>>) attributes {dimension_semantics = [#tpu.dimension_semantics<parallel>], iteration_bounds = array<i64: 1>, scalar_prefetch = 0 : i64, scratch_operands = 1 : i64, tpu.core_type = #tpu.core_type<tc>, window_params = [{transform_indices = @transform_0, window_bounds = array<i64: 2, 4, 16, 16>}, {pipeline_mode = #tpu.pipeline_mode<synchronous>, transform_indices = @transform_1, window_bounds = array<i64: 4, 9>}, {pipeline_mode = #tpu.pipeline_mode<synchronous>, transform_indices = @transform_2, window_bounds = array<i64: 8, 4>}, {pipeline_mode = #tpu.pipeline_mode<synchronous>, transform_indices = @transform_3, window_bounds = array<i64: 8, 1>}, {transform_indices = @transform_4, window_bounds = array<i64: 2, 8, 16, 16>}]} {
    %c0 = arith.constant 0 : index
    %c0_0 = arith.constant 0 : index
    %0 = vector.load %arg2[%c0, %c0_0] : memref<4x9xf32, #tpu.memory_space<vmem>>, vector<4x9xf32>
    %c0_1 = arith.constant 0 : index
    %c0_2 = arith.constant 0 : index
    %1 = vector.load %arg3[%c0_1, %c0_2] : memref<8x4xf32, #tpu.memory_space<vmem>>, vector<8x4xf32>
    %c0_3 = arith.constant 0 : index
    %c0_4 = arith.constant 0 : index
    %2 = vector.load %arg4[%c0_3, %c0_4] : memref<8x1xf32, #tpu.memory_space<vmem>>, vector<8x1xf32>
    %cst = arith.constant 0.000000e+00 : f32
    %3 = vector.broadcast %cst : f32 to vector<4x18x18xf32>
    %c0_5 = arith.constant 0 : index
    %c0_6 = arith.constant 0 : index
    %c0_7 = arith.constant 0 : index
    %4 = vector.load %arg6[%c0_5, %c0_6, %c0_7] : memref<4x18x18xf32, #tpu.memory_space<vmem>>, vector<4x18x18xf32>
    tpu.vector_store %arg6[%c0_5, %c0_6, %c0_7], %3 {strides = array<i32>} : memref<4x18x18xf32, #tpu.memory_space<vmem>>, vector<4x18x18xf32>,
    %c0_8 = arith.constant 0 : index
    %c0_9 = arith.constant 0 : index
    %c0_10 = arith.constant 0 : index
    %c0_11 = arith.constant 0 : index
    %5 = vector.load %arg1[%c0_8, %c0_9, %c0_10, %c0_11] : memref<2x4x16x16xf32, #tpu.memory_space<vmem>>, vector<1x4x16x16xf32>
    %6 = vector.shape_cast %5 : vector<1x4x16x16xf32> to vector<4x16x16xf32>
    %cst_12 = arith.constant 0.000000e+00 : f32
    %7 = vector.broadcast %cst_12 : f32 to vector<4x16x1xf32>
    %8 = tpu.concatenate %7, %6, %7 in 2 : vector<4x16x1xf32>, vector<4x16x16xf32>, vector<4x16x1xf32> -> vector<4x16x18xf32>
    %c0_13 = arith.constant 0 : index
    %c1 = arith.constant 1 : index
    %c0_14 = arith.constant 0 : index
    %9 = vector.load %arg6[%c0_13, %c1, %c0_14] : memref<4x18x18xf32, #tpu.memory_space<vmem>>, vector<4x16x18xf32>
    tpu.vector_store %arg6[%c0_13, %c1, %c0_14], %8 {strides = array<i32>} : memref<4x18x18xf32, #tpu.memory_space<vmem>>, vector<4x16x18xf32>,
    %c0_15 = arith.constant 0 : index
    %c0_16 = arith.constant 0 : index
    %c0_17 = arith.constant 0 : index
    %10 = vector.load %arg6[%c0_15, %c0_16, %c0_17] : memref<4x18x18xf32, #tpu.memory_space<vmem>>, vector<1x16x16xf32>
    %11 = vector.shape_cast %10 : vector<1x16x16xf32> to vector<16x16xf32>
    %12 = vector.extract_strided_slice %0 {offsets = [0, 0], sizes = [1, 1], strides = [1, 1]} : vector<4x9xf32> to vector<1x1xf32>
    %13 = vector.broadcast %12 : vector<1x1xf32> to vector<16x16xf32>
    %14 = arith.mulf %11, %13 : vector<16x16xf32>
    %c0_18 = arith.constant 0 : index
    %c0_19 = arith.constant 0 : index
    %c1_20 = arith.constant 1 : index
    %15 = vector.load %arg6[%c0_18, %c0_19, %c1_20] : memref<4x18x18xf32, #tpu.memory_space<vmem>>, vector<1x16x16xf32>
    %16 = vector.shape_cast %15 : vector<1x16x16xf32> to vector<16x16xf32>
    %17 = vector.extract_strided_slice %0 {offsets = [0, 1], sizes = [1, 1], strides = [1, 1]} : vector<4x9xf32> to vector<1x1xf32>
    %18 = vector.broadcast %17 : vector<1x1xf32> to vector<16x16xf32>
    %19 = arith.mulf %16, %18 : vector<16x16xf32>
    %20 = arith.addf %14, %19 : vector<16x16xf32>
    %c0_21 = arith.constant 0 : index
    %c0_22 = arith.constant 0 : index
    %c2 = arith.constant 2 : index
    %21 = vector.load %arg6[%c0_21, %c0_22, %c2] : memref<4x18x18xf32, #tpu.memory_space<vmem>>, vector<1x16x16xf32>
    %22 = vector.shape_cast %21 : vector<1x16x16xf32> to vector<16x16xf32>
    %23 = vector.extract_strided_slice %0 {offsets = [0, 2], sizes = [1, 1], strides = [1, 1]} : vector<4x9xf32> to vector<1x1xf32>
    %24 = vector.broadcast %23 : vector<1x1xf32> to vector<16x16xf32>
    %25 = arith.mulf %22, %24 : vector<16x16xf32>
    %26 = arith.addf %20, %25 : vector<16x16xf32>
    %c0_23 = arith.constant 0 : index
    %c1_24 = arith.constant 1 : index
    %c0_25 = arith.constant 0 : index
    %27 = vector.load %arg6[%c0_23, %c1_24, %c0_25] : memref<4x18x18xf32, #tpu.memory_space<vmem>>, vector<1x16x16xf32>
    %28 = vector.shape_cast %27 : vector<1x16x16xf32> to vector<16x16xf32>
    %29 = vector.extract_strided_slice %0 {offsets = [0, 3], sizes = [1, 1], strides = [1, 1]} : vector<4x9xf32> to vector<1x1xf32>
    %30 = vector.broadcast %29 : vector<1x1xf32> to vector<16x16xf32>
    %31 = arith.mulf %28, %30 : vector<16x16xf32>
    %32 = arith.addf %26, %31 : vector<16x16xf32>
    %c0_26 = arith.constant 0 : index
    %c1_27 = arith.constant 1 : index
    %c1_28 = arith.constant 1 : index
    %33 = vector.load %arg6[%c0_26, %c1_27, %c1_28] : memref<4x18x18xf32, #tpu.memory_space<vmem>>, vector<1x16x16xf32>
    %34 = vector.shape_cast %33 : vector<1x16x16xf32> to vector<16x16xf32>
    %35 = vector.extract_strided_slice %0 {offsets = [0, 4], sizes = [1, 1], strides = [1, 1]} : vector<4x9xf32> to vector<1x1xf32>
    %36 = vector.broadcast %35 : vector<1x1xf32> to vector<16x16xf32>
    %37 = arith.mulf %34, %36 : vector<16x16xf32>
    %38 = arith.addf %32, %37 : vector<16x16xf32>
    %c0_29 = arith.constant 0 : index
    %c1_30 = arith.constant 1 : index
    %c2_31 = arith.constant 2 : index
    %39 = vector.load %arg6[%c0_29, %c1_30, %c2_31] : memref<4x18x18xf32, #tpu.memory_space<vmem>>, vector<1x16x16xf32>
    %40 = vector.shape_cast %39 : vector<1x16x16xf32> to vector<16x16xf32>
    %41 = vector.extract_strided_slice %0 {offsets = [0, 5], sizes = [1, 1], strides = [1, 1]} : vector<4x9xf32> to vector<1x1xf32>
    %42 = vector.broadcast %41 : vector<1x1xf32> to vector<16x16xf32>
    %43 = arith.mulf %40, %42 : vector<16x16xf32>
    %44 = arith.addf %38, %43 : vector<16x16xf32>
    %c0_32 = arith.constant 0 : index
    %c2_33 = arith.constant 2 : index
    %c0_34 = arith.constant 0 : index
    %45 = vector.load %arg6[%c0_32, %c2_33, %c0_34] : memref<4x18x18xf32, #tpu.memory_space<vmem>>, vector<1x16x16xf32>
    %46 = vector.shape_cast %45 : vector<1x16x16xf32> to vector<16x16xf32>
    %47 = vector.extract_strided_slice %0 {offsets = [0, 6], sizes = [1, 1], strides = [1, 1]} : vector<4x9xf32> to vector<1x1xf32>
    %48 = vector.broadcast %47 : vector<1x1xf32> to vector<16x16xf32>
    %49 = arith.mulf %46, %48 : vector<16x16xf32>
    %50 = arith.addf %44, %49 : vector<16x16xf32>
    %c0_35 = arith.constant 0 : index
    %c2_36 = arith.constant 2 : index
    %c1_37 = arith.constant 1 : index
    %51 = vector.load %arg6[%c0_35, %c2_36, %c1_37] : memref<4x18x18xf32, #tpu.memory_space<vmem>>, vector<1x16x16xf32>
    %52 = vector.shape_cast %51 : vector<1x16x16xf32> to vector<16x16xf32>
    %53 = vector.extract_strided_slice %0 {offsets = [0, 7], sizes = [1, 1], strides = [1, 1]} : vector<4x9xf32> to vector<1x1xf32>
    %54 = vector.broadcast %53 : vector<1x1xf32> to vector<16x16xf32>
    %55 = arith.mulf %52, %54 : vector<16x16xf32>
    %56 = arith.addf %50, %55 : vector<16x16xf32>
    %c0_38 = arith.constant 0 : index
    %c2_39 = arith.constant 2 : index
    %c2_40 = arith.constant 2 : index
    %57 = vector.load %arg6[%c0_38, %c2_39, %c2_40] : memref<4x18x18xf32, #tpu.memory_space<vmem>>, vector<1x16x16xf32>
    %58 = vector.shape_cast %57 : vector<1x16x16xf32> to vector<16x16xf32>
    %59 = vector.extract_strided_slice %0 {offsets = [0, 8], sizes = [1, 1], strides = [1, 1]} : vector<4x9xf32> to vector<1x1xf32>
    %60 = vector.broadcast %59 : vector<1x1xf32> to vector<16x16xf32>
    %61 = arith.mulf %58, %60 : vector<16x16xf32>
    %62 = arith.addf %56, %61 : vector<16x16xf32>
    %c1_41 = arith.constant 1 : index
    %c0_42 = arith.constant 0 : index
    %c0_43 = arith.constant 0 : index
    %63 = vector.load %arg6[%c1_41, %c0_42, %c0_43] : memref<4x18x18xf32, #tpu.memory_space<vmem>>, vector<1x16x16xf32>
    %64 = vector.shape_cast %63 : vector<1x16x16xf32> to vector<16x16xf32>
    %65 = vector.extract_strided_slice %0 {offsets = [1, 0], sizes = [1, 1], strides = [1, 1]} : vector<4x9xf32> to vector<1x1xf32>
    %66 = vector.broadcast %65 : vector<1x1xf32> to vector<16x16xf32>
    %67 = arith.mulf %64, %66 : vector<16x16xf32>
    %c1_44 = arith.constant 1 : index
    %c0_45 = arith.constant 0 : index
    %c1_46 = arith.constant 1 : index
    %68 = vector.load %arg6[%c1_44, %c0_45, %c1_46] : memref<4x18x18xf32, #tpu.memory_space<vmem>>, vector<1x16x16xf32>
    %69 = vector.shape_cast %68 : vector<1x16x16xf32> to vector<16x16xf32>
    %70 = vector.extract_strided_slice %0 {offsets = [1, 1], sizes = [1, 1], strides = [1, 1]} : vector<4x9xf32> to vector<1x1xf32>
    %71 = vector.broadcast %70 : vector<1x1xf32> to vector<16x16xf32>
    %72 = arith.mulf %69, %71 : vector<16x16xf32>
    %73 = arith.addf %67, %72 : vector<16x16xf32>
    %c1_47 = arith.constant 1 : index
    %c0_48 = arith.constant 0 : index
    %c2_49 = arith.constant 2 : index
    %74 = vector.load %arg6[%c1_47, %c0_48, %c2_49] : memref<4x18x18xf32, #tpu.memory_space<vmem>>, vector<1x16x16xf32>
    %75 = vector.shape_cast %74 : vector<1x16x16xf32> to vector<16x16xf32>
    %76 = vector.extract_strided_slice %0 {offsets = [1, 2], sizes = [1, 1], strides = [1, 1]} : vector<4x9xf32> to vector<1x1xf32>
    %77 = vector.broadcast %76 : vector<1x1xf32> to vector<16x16xf32>
    %78 = arith.mulf %75, %77 : vector<16x16xf32>
    %79 = arith.addf %73, %78 : vector<16x16xf32>
    %c1_50 = arith.constant 1 : index
    %c1_51 = arith.constant 1 : index
    %c0_52 = arith.constant 0 : index
    %80 = vector.load %arg6[%c1_50, %c1_51, %c0_52] : memref<4x18x18xf32, #tpu.memory_space<vmem>>, vector<1x16x16xf32>
    %81 = vector.shape_cast %80 : vector<1x16x16xf32> to vector<16x16xf32>
    %82 = vector.extract_strided_slice %0 {offsets = [1, 3], sizes = [1, 1], strides = [1, 1]} : vector<4x9xf32> to vector<1x1xf32>
    %83 = vector.broadcast %82 : vector<1x1xf32> to vector<16x16xf32>
    %84 = arith.mulf %81, %83 : vector<16x16xf32>
    %85 = arith.addf %79, %84 : vector<16x16xf32>
    %c1_53 = arith.constant 1 : index
    %c1_54 = arith.constant 1 : index
    %c1_55 = arith.constant 1 : index
    %86 = vector.load %arg6[%c1_53, %c1_54, %c1_55] : memref<4x18x18xf32, #tpu.memory_space<vmem>>, vector<1x16x16xf32>
    %87 = vector.shape_cast %86 : vector<1x16x16xf32> to vector<16x16xf32>
    %88 = vector.extract_strided_slice %0 {offsets = [1, 4], sizes = [1, 1], strides = [1, 1]} : vector<4x9xf32> to vector<1x1xf32>
    %89 = vector.broadcast %88 : vector<1x1xf32> to vector<16x16xf32>
    %90 = arith.mulf %87, %89 : vector<16x16xf32>
    %91 = arith.addf %85, %90 : vector<16x16xf32>
    %c1_56 = arith.constant 1 : index
    %c1_57 = arith.constant 1 : index
    %c2_58 = arith.constant 2 : index
    %92 = vector.load %arg6[%c1_56, %c1_57, %c2_58] : memref<4x18x18xf32, #tpu.memory_space<vmem>>, vector<1x16x16xf32>
    %93 = vector.shape_cast %92 : vector<1x16x16xf32> to vector<16x16xf32>
    %94 = vector.extract_strided_slice %0 {offsets = [1, 5], sizes = [1, 1], strides = [1, 1]} : vector<4x9xf32> to vector<1x1xf32>
    %95 = vector.broadcast %94 : vector<1x1xf32> to vector<16x16xf32>
    %96 = arith.mulf %93, %95 : vector<16x16xf32>
    %97 = arith.addf %91, %96 : vector<16x16xf32>
    %c1_59 = arith.constant 1 : index
    %c2_60 = arith.constant 2 : index
    %c0_61 = arith.constant 0 : index
    %98 = vector.load %arg6[%c1_59, %c2_60, %c0_61] : memref<4x18x18xf32, #tpu.memory_space<vmem>>, vector<1x16x16xf32>
    %99 = vector.shape_cast %98 : vector<1x16x16xf32> to vector<16x16xf32>
    %100 = vector.extract_strided_slice %0 {offsets = [1, 6], sizes = [1, 1], strides = [1, 1]} : vector<4x9xf32> to vector<1x1xf32>
    %101 = vector.broadcast %100 : vector<1x1xf32> to vector<16x16xf32>
    %102 = arith.mulf %99, %101 : vector<16x16xf32>
    %103 = arith.addf %97, %102 : vector<16x16xf32>
    %c1_62 = arith.constant 1 : index
    %c2_63 = arith.constant 2 : index
    %c1_64 = arith.constant 1 : index
    %104 = vector.load %arg6[%c1_62, %c2_63, %c1_64] : memref<4x18x18xf32, #tpu.memory_space<vmem>>, vector<1x16x16xf32>
    %105 = vector.shape_cast %104 : vector<1x16x16xf32> to vector<16x16xf32>
    %106 = vector.extract_strided_slice %0 {offsets = [1, 7], sizes = [1, 1], strides = [1, 1]} : vector<4x9xf32> to vector<1x1xf32>
    %107 = vector.broadcast %106 : vector<1x1xf32> to vector<16x16xf32>
    %108 = arith.mulf %105, %107 : vector<16x16xf32>
    %109 = arith.addf %103, %108 : vector<16x16xf32>
    %c1_65 = arith.constant 1 : index
    %c2_66 = arith.constant 2 : index
    %c2_67 = arith.constant 2 : index
    %110 = vector.load %arg6[%c1_65, %c2_66, %c2_67] : memref<4x18x18xf32, #tpu.memory_space<vmem>>, vector<1x16x16xf32>
    %111 = vector.shape_cast %110 : vector<1x16x16xf32> to vector<16x16xf32>
    %112 = vector.extract_strided_slice %0 {offsets = [1, 8], sizes = [1, 1], strides = [1, 1]} : vector<4x9xf32> to vector<1x1xf32>
    %113 = vector.broadcast %112 : vector<1x1xf32> to vector<16x16xf32>
    %114 = arith.mulf %111, %113 : vector<16x16xf32>
    %115 = arith.addf %109, %114 : vector<16x16xf32>
    %c2_68 = arith.constant 2 : index
    %c0_69 = arith.constant 0 : index
    %c0_70 = arith.constant 0 : index
    %116 = vector.load %arg6[%c2_68, %c0_69, %c0_70] : memref<4x18x18xf32, #tpu.memory_space<vmem>>, vector<1x16x16xf32>
    %117 = vector.shape_cast %116 : vector<1x16x16xf32> to vector<16x16xf32>
    %118 = vector.extract_strided_slice %0 {offsets = [2, 0], sizes = [1, 1], strides = [1, 1]} : vector<4x9xf32> to vector<1x1xf32>
    %119 = vector.broadcast %118 : vector<1x1xf32> to vector<16x16xf32>
    %120 = arith.mulf %117, %119 : vector<16x16xf32>
    %c2_71 = arith.constant 2 : index
    %c0_72 = arith.constant 0 : index
    %c1_73 = arith.constant 1 : index
    %121 = vector.load %arg6[%c2_71, %c0_72, %c1_73] : memref<4x18x18xf32, #tpu.memory_space<vmem>>, vector<1x16x16xf32>
    %122 = vector.shape_cast %121 : vector<1x16x16xf32> to vector<16x16xf32>
    %123 = vector.extract_strided_slice %0 {offsets = [2, 1], sizes = [1, 1], strides = [1, 1]} : vector<4x9xf32> to vector<1x1xf32>
    %124 = vector.broadcast %123 : vector<1x1xf32> to vector<16x16xf32>
    %125 = arith.mulf %122, %124 : vector<16x16xf32>
    %126 = arith.addf %120, %125 : vector<16x16xf32>
    %c2_74 = arith.constant 2 : index
    %c0_75 = arith.constant 0 : index
    %c2_76 = arith.constant 2 : index
    %127 = vector.load %arg6[%c2_74, %c0_75, %c2_76] : memref<4x18x18xf32, #tpu.memory_space<vmem>>, vector<1x16x16xf32>
    %128 = vector.shape_cast %127 : vector<1x16x16xf32> to vector<16x16xf32>
    %129 = vector.extract_strided_slice %0 {offsets = [2, 2], sizes = [1, 1], strides = [1, 1]} : vector<4x9xf32> to vector<1x1xf32>
    %130 = vector.broadcast %129 : vector<1x1xf32> to vector<16x16xf32>
    %131 = arith.mulf %128, %130 : vector<16x16xf32>
    %132 = arith.addf %126, %131 : vector<16x16xf32>
    %c2_77 = arith.constant 2 : index
    %c1_78 = arith.constant 1 : index
    %c0_79 = arith.constant 0 : index
    %133 = vector.load %arg6[%c2_77, %c1_78, %c0_79] : memref<4x18x18xf32, #tpu.memory_space<vmem>>, vector<1x16x16xf32>
    %134 = vector.shape_cast %133 : vector<1x16x16xf32> to vector<16x16xf32>
    %135 = vector.extract_strided_slice %0 {offsets = [2, 3], sizes = [1, 1], strides = [1, 1]} : vector<4x9xf32> to vector<1x1xf32>
    %136 = vector.broadcast %135 : vector<1x1xf32> to vector<16x16xf32>
    %137 = arith.mulf %134, %136 : vector<16x16xf32>
    %138 = arith.addf %132, %137 : vector<16x16xf32>
    %c2_80 = arith.constant 2 : index
    %c1_81 = arith.constant 1 : index
    %c1_82 = arith.constant 1 : index
    %139 = vector.load %arg6[%c2_80, %c1_81, %c1_82] : memref<4x18x18xf32, #tpu.memory_space<vmem>>, vector<1x16x16xf32>
    %140 = vector.shape_cast %139 : vector<1x16x16xf32> to vector<16x16xf32>
    %141 = vector.extract_strided_slice %0 {offsets = [2, 4], sizes = [1, 1], strides = [1, 1]} : vector<4x9xf32> to vector<1x1xf32>
    %142 = vector.broadcast %141 : vector<1x1xf32> to vector<16x16xf32>
    %143 = arith.mulf %140, %142 : vector<16x16xf32>
    %144 = arith.addf %138, %143 : vector<16x16xf32>
    %c2_83 = arith.constant 2 : index
    %c1_84 = arith.constant 1 : index
    %c2_85 = arith.constant 2 : index
    %145 = vector.load %arg6[%c2_83, %c1_84, %c2_85] : memref<4x18x18xf32, #tpu.memory_space<vmem>>, vector<1x16x16xf32>
    %146 = vector.shape_cast %145 : vector<1x16x16xf32> to vector<16x16xf32>
    %147 = vector.extract_strided_slice %0 {offsets = [2, 5], sizes = [1, 1], strides = [1, 1]} : vector<4x9xf32> to vector<1x1xf32>
    %148 = vector.broadcast %147 : vector<1x1xf32> to vector<16x16xf32>
    %149 = arith.mulf %146, %148 : vector<16x16xf32>
    %150 = arith.addf %144, %149 : vector<16x16xf32>
    %c2_86 = arith.constant 2 : index
    %c2_87 = arith.constant 2 : index
    %c0_88 = arith.constant 0 : index
    %151 = vector.load %arg6[%c2_86, %c2_87, %c0_88] : memref<4x18x18xf32, #tpu.memory_space<vmem>>, vector<1x16x16xf32>
    %152 = vector.shape_cast %151 : vector<1x16x16xf32> to vector<16x16xf32>
    %153 = vector.extract_strided_slice %0 {offsets = [2, 6], sizes = [1, 1], strides = [1, 1]} : vector<4x9xf32> to vector<1x1xf32>
    %154 = vector.broadcast %153 : vector<1x1xf32> to vector<16x16xf32>
    %155 = arith.mulf %152, %154 : vector<16x16xf32>
    %156 = arith.addf %150, %155 : vector<16x16xf32>
    %c2_89 = arith.constant 2 : index
    %c2_90 = arith.constant 2 : index
    %c1_91 = arith.constant 1 : index
    %157 = vector.load %arg6[%c2_89, %c2_90, %c1_91] : memref<4x18x18xf32, #tpu.memory_space<vmem>>, vector<1x16x16xf32>
    %158 = vector.shape_cast %157 : vector<1x16x16xf32> to vector<16x16xf32>
    %159 = vector.extract_strided_slice %0 {offsets = [2, 7], sizes = [1, 1], strides = [1, 1]} : vector<4x9xf32> to vector<1x1xf32>
    %160 = vector.broadcast %159 : vector<1x1xf32> to vector<16x16xf32>
    %161 = arith.mulf %158, %160 : vector<16x16xf32>
    %162 = arith.addf %156, %161 : vector<16x16xf32>
    %c2_92 = arith.constant 2 : index
    %c2_93 = arith.constant 2 : index
    %c2_94 = arith.constant 2 : index
    %163 = vector.load %arg6[%c2_92, %c2_93, %c2_94] : memref<4x18x18xf32, #tpu.memory_space<vmem>>, vector<1x16x16xf32>
    %164 = vector.shape_cast %163 : vector<1x16x16xf32> to vector<16x16xf32>
    %165 = vector.extract_strided_slice %0 {offsets = [2, 8], sizes = [1, 1], strides = [1, 1]} : vector<4x9xf32> to vector<1x1xf32>
    %166 = vector.broadcast %165 : vector<1x1xf32> to vector<16x16xf32>
    %167 = arith.mulf %164, %166 : vector<16x16xf32>
    %168 = arith.addf %162, %167 : vector<16x16xf32>
    %c3 = arith.constant 3 : index
    %c0_95 = arith.constant 0 : index
    %c0_96 = arith.constant 0 : index
    %169 = vector.load %arg6[%c3, %c0_95, %c0_96] : memref<4x18x18xf32, #tpu.memory_space<vmem>>, vector<1x16x16xf32>
    %170 = vector.shape_cast %169 : vector<1x16x16xf32> to vector<16x16xf32>
    %171 = vector.extract_strided_slice %0 {offsets = [3, 0], sizes = [1, 1], strides = [1, 1]} : vector<4x9xf32> to vector<1x1xf32>
    %172 = vector.broadcast %171 : vector<1x1xf32> to vector<16x16xf32>
    %173 = arith.mulf %170, %172 : vector<16x16xf32>
    %c3_97 = arith.constant 3 : index
    %c0_98 = arith.constant 0 : index
    %c1_99 = arith.constant 1 : index
    %174 = vector.load %arg6[%c3_97, %c0_98, %c1_99] : memref<4x18x18xf32, #tpu.memory_space<vmem>>, vector<1x16x16xf32>
    %175 = vector.shape_cast %174 : vector<1x16x16xf32> to vector<16x16xf32>
    %176 = vector.extract_strided_slice %0 {offsets = [3, 1], sizes = [1, 1], strides = [1, 1]} : vector<4x9xf32> to vector<1x1xf32>
    %177 = vector.broadcast %176 : vector<1x1xf32> to vector<16x16xf32>
    %178 = arith.mulf %175, %177 : vector<16x16xf32>
    %179 = arith.addf %173, %178 : vector<16x16xf32>
    %c3_100 = arith.constant 3 : index
    %c0_101 = arith.constant 0 : index
    %c2_102 = arith.constant 2 : index
    %180 = vector.load %arg6[%c3_100, %c0_101, %c2_102] : memref<4x18x18xf32, #tpu.memory_space<vmem>>, vector<1x16x16xf32>
    %181 = vector.shape_cast %180 : vector<1x16x16xf32> to vector<16x16xf32>
    %182 = vector.extract_strided_slice %0 {offsets = [3, 2], sizes = [1, 1], strides = [1, 1]} : vector<4x9xf32> to vector<1x1xf32>
    %183 = vector.broadcast %182 : vector<1x1xf32> to vector<16x16xf32>
    %184 = arith.mulf %181, %183 : vector<16x16xf32>
    %185 = arith.addf %179, %184 : vector<16x16xf32>
    %c3_103 = arith.constant 3 : index
    %c1_104 = arith.constant 1 : index
    %c0_105 = arith.constant 0 : index
    %186 = vector.load %arg6[%c3_103, %c1_104, %c0_105] : memref<4x18x18xf32, #tpu.memory_space<vmem>>, vector<1x16x16xf32>
    %187 = vector.shape_cast %186 : vector<1x16x16xf32> to vector<16x16xf32>
    %188 = vector.extract_strided_slice %0 {offsets = [3, 3], sizes = [1, 1], strides = [1, 1]} : vector<4x9xf32> to vector<1x1xf32>
    %189 = vector.broadcast %188 : vector<1x1xf32> to vector<16x16xf32>
    %190 = arith.mulf %187, %189 : vector<16x16xf32>
    %191 = arith.addf %185, %190 : vector<16x16xf32>
    %c3_106 = arith.constant 3 : index
    %c1_107 = arith.constant 1 : index
    %c1_108 = arith.constant 1 : index
    %192 = vector.load %arg6[%c3_106, %c1_107, %c1_108] : memref<4x18x18xf32, #tpu.memory_space<vmem>>, vector<1x16x16xf32>
    %193 = vector.shape_cast %192 : vector<1x16x16xf32> to vector<16x16xf32>
    %194 = vector.extract_strided_slice %0 {offsets = [3, 4], sizes = [1, 1], strides = [1, 1]} : vector<4x9xf32> to vector<1x1xf32>
    %195 = vector.broadcast %194 : vector<1x1xf32> to vector<16x16xf32>
    %196 = arith.mulf %193, %195 : vector<16x16xf32>
    %197 = arith.addf %191, %196 : vector<16x16xf32>
    %c3_109 = arith.constant 3 : index
    %c1_110 = arith.constant 1 : index
    %c2_111 = arith.constant 2 : index
    %198 = vector.load %arg6[%c3_109, %c1_110, %c2_111] : memref<4x18x18xf32, #tpu.memory_space<vmem>>, vector<1x16x16xf32>
    %199 = vector.shape_cast %198 : vector<1x16x16xf32> to vector<16x16xf32>
    %200 = vector.extract_strided_slice %0 {offsets = [3, 5], sizes = [1, 1], strides = [1, 1]} : vector<4x9xf32> to vector<1x1xf32>
    %201 = vector.broadcast %200 : vector<1x1xf32> to vector<16x16xf32>
    %202 = arith.mulf %199, %201 : vector<16x16xf32>
    %203 = arith.addf %197, %202 : vector<16x16xf32>
    %c3_112 = arith.constant 3 : index
    %c2_113 = arith.constant 2 : index
    %c0_114 = arith.constant 0 : index
    %204 = vector.load %arg6[%c3_112, %c2_113, %c0_114] : memref<4x18x18xf32, #tpu.memory_space<vmem>>, vector<1x16x16xf32>
    %205 = vector.shape_cast %204 : vector<1x16x16xf32> to vector<16x16xf32>
    %206 = vector.extract_strided_slice %0 {offsets = [3, 6], sizes = [1, 1], strides = [1, 1]} : vector<4x9xf32> to vector<1x1xf32>
    %207 = vector.broadcast %206 : vector<1x1xf32> to vector<16x16xf32>
    %208 = arith.mulf %205, %207 : vector<16x16xf32>
    %209 = arith.addf %203, %208 : vector<16x16xf32>
    %c3_115 = arith.constant 3 : index
    %c2_116 = arith.constant 2 : index
    %c1_117 = arith.constant 1 : index
    %210 = vector.load %arg6[%c3_115, %c2_116, %c1_117] : memref<4x18x18xf32, #tpu.memory_space<vmem>>, vector<1x16x16xf32>
    %211 = vector.shape_cast %210 : vector<1x16x16xf32> to vector<16x16xf32>
    %212 = vector.extract_strided_slice %0 {offsets = [3, 7], sizes = [1, 1], strides = [1, 1]} : vector<4x9xf32> to vector<1x1xf32>
    %213 = vector.broadcast %212 : vector<1x1xf32> to vector<16x16xf32>
    %214 = arith.mulf %211, %213 : vector<16x16xf32>
    %215 = arith.addf %209, %214 : vector<16x16xf32>
    %c3_118 = arith.constant 3 : index
    %c2_119 = arith.constant 2 : index
    %c2_120 = arith.constant 2 : index
    %216 = vector.load %arg6[%c3_118, %c2_119, %c2_120] : memref<4x18x18xf32, #tpu.memory_space<vmem>>, vector<1x16x16xf32>
    %217 = vector.shape_cast %216 : vector<1x16x16xf32> to vector<16x16xf32>
    %218 = vector.extract_strided_slice %0 {offsets = [3, 8], sizes = [1, 1], strides = [1, 1]} : vector<4x9xf32> to vector<1x1xf32>
    %219 = vector.broadcast %218 : vector<1x1xf32> to vector<16x16xf32>
    %220 = arith.mulf %217, %219 : vector<16x16xf32>
    %221 = arith.addf %215, %220 : vector<16x16xf32>
    %222 = vector.extract_strided_slice %1 {offsets = [0, 0], sizes = [1, 1], strides = [1, 1]} : vector<8x4xf32> to vector<1x1xf32>
    %223 = vector.broadcast %222 : vector<1x1xf32> to vector<16x16xf32>
    %224 = arith.mulf %62, %223 : vector<16x16xf32>
    %225 = vector.extract_strided_slice %1 {offsets = [0, 1], sizes = [1, 1], strides = [1, 1]} : vector<8x4xf32> to vector<1x1xf32>
    %226 = vector.broadcast %225 : vector<1x1xf32> to vector<16x16xf32>
    %227 = arith.mulf %115, %226 : vector<16x16xf32>
    %228 = arith.addf %224, %227 : vector<16x16xf32>
    %229 = vector.extract_strided_slice %1 {offsets = [0, 2], sizes = [1, 1], strides = [1, 1]} : vector<8x4xf32> to vector<1x1xf32>
    %230 = vector.broadcast %229 : vector<1x1xf32> to vector<16x16xf32>
    %231 = arith.mulf %168, %230 : vector<16x16xf32>
    %232 = arith.addf %228, %231 : vector<16x16xf32>
    %233 = vector.extract_strided_slice %1 {offsets = [0, 3], sizes = [1, 1], strides = [1, 1]} : vector<8x4xf32> to vector<1x1xf32>
    %234 = vector.broadcast %233 : vector<1x1xf32> to vector<16x16xf32>
    %235 = arith.mulf %221, %234 : vector<16x16xf32>
    %236 = arith.addf %232, %235 : vector<16x16xf32>
    %237 = vector.extract_strided_slice %2 {offsets = [0, 0], sizes = [1, 1], strides = [1, 1]} : vector<8x1xf32> to vector<1x1xf32>
    %238 = vector.broadcast %237 : vector<1x1xf32> to vector<16x16xf32>
    %239 = arith.addf %236, %238 : vector<16x16xf32>
    %c0_121 = arith.constant 0 : index
    %c0_122 = arith.constant 0 : index
    %c0_123 = arith.constant 0 : index
    %c0_124 = arith.constant 0 : index
    %240 = vector.load %arg5[%c0_121, %c0_122, %c0_123, %c0_124] : memref<2x8x16x16xf32, #tpu.memory_space<vmem>>, vector<1x1x16x16xf32>
    %241 = vector.shape_cast %240 : vector<1x1x16x16xf32> to vector<16x16xf32>
    %242 = vector.shape_cast %239 : vector<16x16xf32> to vector<1x1x16x16xf32>
    tpu.vector_store %arg5[%c0_121, %c0_122, %c0_123, %c0_124], %242 {strides = array<i32>} : memref<2x8x16x16xf32, #tpu.memory_space<vmem>>, vector<1x1x16x16xf32>,
    %243 = vector.extract_strided_slice %1 {offsets = [1, 0], sizes = [1, 1], strides = [1, 1]} : vector<8x4xf32> to vector<1x1xf32>
    %244 = vector.broadcast %243 : vector<1x1xf32> to vector<16x16xf32>
    %245 = arith.mulf %62, %244 : vector<16x16xf32>
    %246 = vector.extract_strided_slice %1 {offsets = [1, 1], sizes = [1, 1], strides = [1, 1]} : vector<8x4xf32> to vector<1x1xf32>
    %247 = vector.broadcast %246 : vector<1x1xf32> to vector<16x16xf32>
    %248 = arith.mulf %115, %247 : vector<16x16xf32>
    %249 = arith.addf %245, %248 : vector<16x16xf32>
    %250 = vector.extract_strided_slice %1 {offsets = [1, 2], sizes = [1, 1], strides = [1, 1]} : vector<8x4xf32> to vector<1x1xf32>
    %251 = vector.broadcast %250 : vector<1x1xf32> to vector<16x16xf32>
    %252 = arith.mulf %168, %251 : vector<16x16xf32>
    %253 = arith.addf %249, %252 : vector<16x16xf32>
    %254 = vector.extract_strided_slice %1 {offsets = [1, 3], sizes = [1, 1], strides = [1, 1]} : vector<8x4xf32> to vector<1x1xf32>
    %255 = vector.broadcast %254 : vector<1x1xf32> to vector<16x16xf32>
    %256 = arith.mulf %221, %255 : vector<16x16xf32>
    %257 = arith.addf %253, %256 : vector<16x16xf32>
    %258 = vector.extract_strided_slice %2 {offsets = [1, 0], sizes = [1, 1], strides = [1, 1]} : vector<8x1xf32> to vector<1x1xf32>
    %259 = vector.broadcast %258 : vector<1x1xf32> to vector<16x16xf32>
    %260 = arith.addf %257, %259 : vector<16x16xf32>
    %c0_125 = arith.constant 0 : index
    %c1_126 = arith.constant 1 : index
    %c0_127 = arith.constant 0 : index
    %c0_128 = arith.constant 0 : index
    %261 = vector.load %arg5[%c0_125, %c1_126, %c0_127, %c0_128] : memref<2x8x16x16xf32, #tpu.memory_space<vmem>>, vector<1x1x16x16xf32>
    %262 = vector.shape_cast %261 : vector<1x1x16x16xf32> to vector<16x16xf32>
    %263 = vector.shape_cast %260 : vector<16x16xf32> to vector<1x1x16x16xf32>
    tpu.vector_store %arg5[%c0_125, %c1_126, %c0_127, %c0_128], %263 {strides = array<i32>} : memref<2x8x16x16xf32, #tpu.memory_space<vmem>>, vector<1x1x16x16xf32>,
    %264 = vector.extract_strided_slice %1 {offsets = [2, 0], sizes = [1, 1], strides = [1, 1]} : vector<8x4xf32> to vector<1x1xf32>
    %265 = vector.broadcast %264 : vector<1x1xf32> to vector<16x16xf32>
    %266 = arith.mulf %62, %265 : vector<16x16xf32>
    %267 = vector.extract_strided_slice %1 {offsets = [2, 1], sizes = [1, 1], strides = [1, 1]} : vector<8x4xf32> to vector<1x1xf32>
    %268 = vector.broadcast %267 : vector<1x1xf32> to vector<16x16xf32>
    %269 = arith.mulf %115, %268 : vector<16x16xf32>
    %270 = arith.addf %266, %269 : vector<16x16xf32>
    %271 = vector.extract_strided_slice %1 {offsets = [2, 2], sizes = [1, 1], strides = [1, 1]} : vector<8x4xf32> to vector<1x1xf32>
    %272 = vector.broadcast %271 : vector<1x1xf32> to vector<16x16xf32>
    %273 = arith.mulf %168, %272 : vector<16x16xf32>
    %274 = arith.addf %270, %273 : vector<16x16xf32>
    %275 = vector.extract_strided_slice %1 {offsets = [2, 3], sizes = [1, 1], strides = [1, 1]} : vector<8x4xf32> to vector<1x1xf32>
    %276 = vector.broadcast %275 : vector<1x1xf32> to vector<16x16xf32>
    %277 = arith.mulf %221, %276 : vector<16x16xf32>
    %278 = arith.addf %274, %277 : vector<16x16xf32>
    %279 = vector.extract_strided_slice %2 {offsets = [2, 0], sizes = [1, 1], strides = [1, 1]} : vector<8x1xf32> to vector<1x1xf32>
    %280 = vector.broadcast %279 : vector<1x1xf32> to vector<16x16xf32>
    %281 = arith.addf %278, %280 : vector<16x16xf32>
    %c0_129 = arith.constant 0 : index
    %c2_130 = arith.constant 2 : index
    %c0_131 = arith.constant 0 : index
    %c0_132 = arith.constant 0 : index
    %282 = vector.load %arg5[%c0_129, %c2_130, %c0_131, %c0_132] : memref<2x8x16x16xf32, #tpu.memory_space<vmem>>, vector<1x1x16x16xf32>
    %283 = vector.shape_cast %282 : vector<1x1x16x16xf32> to vector<16x16xf32>
    %284 = vector.shape_cast %281 : vector<16x16xf32> to vector<1x1x16x16xf32>
    tpu.vector_store %arg5[%c0_129, %c2_130, %c0_131, %c0_132], %284 {strides = array<i32>} : memref<2x8x16x16xf32, #tpu.memory_space<vmem>>, vector<1x1x16x16xf32>,
    %285 = vector.extract_strided_slice %1 {offsets = [3, 0], sizes = [1, 1], strides = [1, 1]} : vector<8x4xf32> to vector<1x1xf32>
    %286 = vector.broadcast %285 : vector<1x1xf32> to vector<16x16xf32>
    %287 = arith.mulf %62, %286 : vector<16x16xf32>
    %288 = vector.extract_strided_slice %1 {offsets = [3, 1], sizes = [1, 1], strides = [1, 1]} : vector<8x4xf32> to vector<1x1xf32>
    %289 = vector.broadcast %288 : vector<1x1xf32> to vector<16x16xf32>
    %290 = arith.mulf %115, %289 : vector<16x16xf32>
    %291 = arith.addf %287, %290 : vector<16x16xf32>
    %292 = vector.extract_strided_slice %1 {offsets = [3, 2], sizes = [1, 1], strides = [1, 1]} : vector<8x4xf32> to vector<1x1xf32>
    %293 = vector.broadcast %292 : vector<1x1xf32> to vector<16x16xf32>
    %294 = arith.mulf %168, %293 : vector<16x16xf32>
    %295 = arith.addf %291, %294 : vector<16x16xf32>
    %296 = vector.extract_strided_slice %1 {offsets = [3, 3], sizes = [1, 1], strides = [1, 1]} : vector<8x4xf32> to vector<1x1xf32>
    %297 = vector.broadcast %296 : vector<1x1xf32> to vector<16x16xf32>
    %298 = arith.mulf %221, %297 : vector<16x16xf32>
    %299 = arith.addf %295, %298 : vector<16x16xf32>
    %300 = vector.extract_strided_slice %2 {offsets = [3, 0], sizes = [1, 1], strides = [1, 1]} : vector<8x1xf32> to vector<1x1xf32>
    %301 = vector.broadcast %300 : vector<1x1xf32> to vector<16x16xf32>
    %302 = arith.addf %299, %301 : vector<16x16xf32>
    %c0_133 = arith.constant 0 : index
    %c3_134 = arith.constant 3 : index
    %c0_135 = arith.constant 0 : index
    %c0_136 = arith.constant 0 : index
    %303 = vector.load %arg5[%c0_133, %c3_134, %c0_135, %c0_136] : memref<2x8x16x16xf32, #tpu.memory_space<vmem>>, vector<1x1x16x16xf32>
    %304 = vector.shape_cast %303 : vector<1x1x16x16xf32> to vector<16x16xf32>
    %305 = vector.shape_cast %302 : vector<16x16xf32> to vector<1x1x16x16xf32>
    tpu.vector_store %arg5[%c0_133, %c3_134, %c0_135, %c0_136], %305 {strides = array<i32>} : memref<2x8x16x16xf32, #tpu.memory_space<vmem>>, vector<1x1x16x16xf32>,
    %306 = vector.extract_strided_slice %1 {offsets = [4, 0], sizes = [1, 1], strides = [1, 1]} : vector<8x4xf32> to vector<1x1xf32>
    %307 = vector.broadcast %306 : vector<1x1xf32> to vector<16x16xf32>
    %308 = arith.mulf %62, %307 : vector<16x16xf32>
    %309 = vector.extract_strided_slice %1 {offsets = [4, 1], sizes = [1, 1], strides = [1, 1]} : vector<8x4xf32> to vector<1x1xf32>
    %310 = vector.broadcast %309 : vector<1x1xf32> to vector<16x16xf32>
    %311 = arith.mulf %115, %310 : vector<16x16xf32>
    %312 = arith.addf %308, %311 : vector<16x16xf32>
    %313 = vector.extract_strided_slice %1 {offsets = [4, 2], sizes = [1, 1], strides = [1, 1]} : vector<8x4xf32> to vector<1x1xf32>
    %314 = vector.broadcast %313 : vector<1x1xf32> to vector<16x16xf32>
    %315 = arith.mulf %168, %314 : vector<16x16xf32>
    %316 = arith.addf %312, %315 : vector<16x16xf32>
    %317 = vector.extract_strided_slice %1 {offsets = [4, 3], sizes = [1, 1], strides = [1, 1]} : vector<8x4xf32> to vector<1x1xf32>
    %318 = vector.broadcast %317 : vector<1x1xf32> to vector<16x16xf32>
    %319 = arith.mulf %221, %318 : vector<16x16xf32>
    %320 = arith.addf %316, %319 : vector<16x16xf32>
    %321 = vector.extract_strided_slice %2 {offsets = [4, 0], sizes = [1, 1], strides = [1, 1]} : vector<8x1xf32> to vector<1x1xf32>
    %322 = vector.broadcast %321 : vector<1x1xf32> to vector<16x16xf32>
    %323 = arith.addf %320, %322 : vector<16x16xf32>
    %c0_137 = arith.constant 0 : index
    %c4 = arith.constant 4 : index
    %c0_138 = arith.constant 0 : index
    %c0_139 = arith.constant 0 : index
    %324 = vector.load %arg5[%c0_137, %c4, %c0_138, %c0_139] : memref<2x8x16x16xf32, #tpu.memory_space<vmem>>, vector<1x1x16x16xf32>
    %325 = vector.shape_cast %324 : vector<1x1x16x16xf32> to vector<16x16xf32>
    %326 = vector.shape_cast %323 : vector<16x16xf32> to vector<1x1x16x16xf32>
    tpu.vector_store %arg5[%c0_137, %c4, %c0_138, %c0_139], %326 {strides = array<i32>} : memref<2x8x16x16xf32, #tpu.memory_space<vmem>>, vector<1x1x16x16xf32>,
    %327 = vector.extract_strided_slice %1 {offsets = [5, 0], sizes = [1, 1], strides = [1, 1]} : vector<8x4xf32> to vector<1x1xf32>
    %328 = vector.broadcast %327 : vector<1x1xf32> to vector<16x16xf32>
    %329 = arith.mulf %62, %328 : vector<16x16xf32>
    %330 = vector.extract_strided_slice %1 {offsets = [5, 1], sizes = [1, 1], strides = [1, 1]} : vector<8x4xf32> to vector<1x1xf32>
    %331 = vector.broadcast %330 : vector<1x1xf32> to vector<16x16xf32>
    %332 = arith.mulf %115, %331 : vector<16x16xf32>
    %333 = arith.addf %329, %332 : vector<16x16xf32>
    %334 = vector.extract_strided_slice %1 {offsets = [5, 2], sizes = [1, 1], strides = [1, 1]} : vector<8x4xf32> to vector<1x1xf32>
    %335 = vector.broadcast %334 : vector<1x1xf32> to vector<16x16xf32>
    %336 = arith.mulf %168, %335 : vector<16x16xf32>
    %337 = arith.addf %333, %336 : vector<16x16xf32>
    %338 = vector.extract_strided_slice %1 {offsets = [5, 3], sizes = [1, 1], strides = [1, 1]} : vector<8x4xf32> to vector<1x1xf32>
    %339 = vector.broadcast %338 : vector<1x1xf32> to vector<16x16xf32>
    %340 = arith.mulf %221, %339 : vector<16x16xf32>
    %341 = arith.addf %337, %340 : vector<16x16xf32>
    %342 = vector.extract_strided_slice %2 {offsets = [5, 0], sizes = [1, 1], strides = [1, 1]} : vector<8x1xf32> to vector<1x1xf32>
    %343 = vector.broadcast %342 : vector<1x1xf32> to vector<16x16xf32>
    %344 = arith.addf %341, %343 : vector<16x16xf32>
    %c0_140 = arith.constant 0 : index
    %c5 = arith.constant 5 : index
    %c0_141 = arith.constant 0 : index
    %c0_142 = arith.constant 0 : index
    %345 = vector.load %arg5[%c0_140, %c5, %c0_141, %c0_142] : memref<2x8x16x16xf32, #tpu.memory_space<vmem>>, vector<1x1x16x16xf32>
    %346 = vector.shape_cast %345 : vector<1x1x16x16xf32> to vector<16x16xf32>
    %347 = vector.shape_cast %344 : vector<16x16xf32> to vector<1x1x16x16xf32>
    tpu.vector_store %arg5[%c0_140, %c5, %c0_141, %c0_142], %347 {strides = array<i32>} : memref<2x8x16x16xf32, #tpu.memory_space<vmem>>, vector<1x1x16x16xf32>,
    %348 = vector.extract_strided_slice %1 {offsets = [6, 0], sizes = [1, 1], strides = [1, 1]} : vector<8x4xf32> to vector<1x1xf32>
    %349 = vector.broadcast %348 : vector<1x1xf32> to vector<16x16xf32>
    %350 = arith.mulf %62, %349 : vector<16x16xf32>
    %351 = vector.extract_strided_slice %1 {offsets = [6, 1], sizes = [1, 1], strides = [1, 1]} : vector<8x4xf32> to vector<1x1xf32>
    %352 = vector.broadcast %351 : vector<1x1xf32> to vector<16x16xf32>
    %353 = arith.mulf %115, %352 : vector<16x16xf32>
    %354 = arith.addf %350, %353 : vector<16x16xf32>
    %355 = vector.extract_strided_slice %1 {offsets = [6, 2], sizes = [1, 1], strides = [1, 1]} : vector<8x4xf32> to vector<1x1xf32>
    %356 = vector.broadcast %355 : vector<1x1xf32> to vector<16x16xf32>
    %357 = arith.mulf %168, %356 : vector<16x16xf32>
    %358 = arith.addf %354, %357 : vector<16x16xf32>
    %359 = vector.extract_strided_slice %1 {offsets = [6, 3], sizes = [1, 1], strides = [1, 1]} : vector<8x4xf32> to vector<1x1xf32>
    %360 = vector.broadcast %359 : vector<1x1xf32> to vector<16x16xf32>
    %361 = arith.mulf %221, %360 : vector<16x16xf32>
    %362 = arith.addf %358, %361 : vector<16x16xf32>
    %363 = vector.extract_strided_slice %2 {offsets = [6, 0], sizes = [1, 1], strides = [1, 1]} : vector<8x1xf32> to vector<1x1xf32>
    %364 = vector.broadcast %363 : vector<1x1xf32> to vector<16x16xf32>
    %365 = arith.addf %362, %364 : vector<16x16xf32>
    %c0_143 = arith.constant 0 : index
    %c6 = arith.constant 6 : index
    %c0_144 = arith.constant 0 : index
    %c0_145 = arith.constant 0 : index
    %366 = vector.load %arg5[%c0_143, %c6, %c0_144, %c0_145] : memref<2x8x16x16xf32, #tpu.memory_space<vmem>>, vector<1x1x16x16xf32>
    %367 = vector.shape_cast %366 : vector<1x1x16x16xf32> to vector<16x16xf32>
    %368 = vector.shape_cast %365 : vector<16x16xf32> to vector<1x1x16x16xf32>
    tpu.vector_store %arg5[%c0_143, %c6, %c0_144, %c0_145], %368 {strides = array<i32>} : memref<2x8x16x16xf32, #tpu.memory_space<vmem>>, vector<1x1x16x16xf32>,
    %369 = vector.extract_strided_slice %1 {offsets = [7, 0], sizes = [1, 1], strides = [1, 1]} : vector<8x4xf32> to vector<1x1xf32>
    %370 = vector.broadcast %369 : vector<1x1xf32> to vector<16x16xf32>
    %371 = arith.mulf %62, %370 : vector<16x16xf32>
    %372 = vector.extract_strided_slice %1 {offsets = [7, 1], sizes = [1, 1], strides = [1, 1]} : vector<8x4xf32> to vector<1x1xf32>
    %373 = vector.broadcast %372 : vector<1x1xf32> to vector<16x16xf32>
    %374 = arith.mulf %115, %373 : vector<16x16xf32>
    %375 = arith.addf %371, %374 : vector<16x16xf32>
    %376 = vector.extract_strided_slice %1 {offsets = [7, 2], sizes = [1, 1], strides = [1, 1]} : vector<8x4xf32> to vector<1x1xf32>
    %377 = vector.broadcast %376 : vector<1x1xf32> to vector<16x16xf32>
    %378 = arith.mulf %168, %377 : vector<16x16xf32>
    %379 = arith.addf %375, %378 : vector<16x16xf32>
    %380 = vector.extract_strided_slice %1 {offsets = [7, 3], sizes = [1, 1], strides = [1, 1]} : vector<8x4xf32> to vector<1x1xf32>
    %381 = vector.broadcast %380 : vector<1x1xf32> to vector<16x16xf32>
    %382 = arith.mulf %221, %381 : vector<16x16xf32>
    %383 = arith.addf %379, %382 : vector<16x16xf32>
    %384 = vector.extract_strided_slice %2 {offsets = [7, 0], sizes = [1, 1], strides = [1, 1]} : vector<8x1xf32> to vector<1x1xf32>
    %385 = vector.broadcast %384 : vector<1x1xf32> to vector<16x16xf32>
    %386 = arith.addf %383, %385 : vector<16x16xf32>
    %c0_146 = arith.constant 0 : index
    %c7 = arith.constant 7 : index
    %c0_147 = arith.constant 0 : index
    %c0_148 = arith.constant 0 : index
    %387 = vector.load %arg5[%c0_146, %c7, %c0_147, %c0_148] : memref<2x8x16x16xf32, #tpu.memory_space<vmem>>, vector<1x1x16x16xf32>
    %388 = vector.shape_cast %387 : vector<1x1x16x16xf32> to vector<16x16xf32>
    %389 = vector.shape_cast %386 : vector<16x16xf32> to vector<1x1x16x16xf32>
    tpu.vector_store %arg5[%c0_146, %c7, %c0_147, %c0_148], %389 {strides = array<i32>} : memref<2x8x16x16xf32, #tpu.memory_space<vmem>>, vector<1x1x16x16xf32>,
    %c1_149 = arith.constant 1 : index
    %c0_150 = arith.constant 0 : index
    %c0_151 = arith.constant 0 : index
    %c0_152 = arith.constant 0 : index
    %390 = vector.load %arg1[%c1_149, %c0_150, %c0_151, %c0_152] : memref<2x4x16x16xf32, #tpu.memory_space<vmem>>, vector<1x4x16x16xf32>
    %391 = vector.shape_cast %390 : vector<1x4x16x16xf32> to vector<4x16x16xf32>
    %cst_153 = arith.constant 0.000000e+00 : f32
    %392 = vector.broadcast %cst_153 : f32 to vector<4x16x1xf32>
    %393 = tpu.concatenate %392, %391, %392 in 2 : vector<4x16x1xf32>, vector<4x16x16xf32>, vector<4x16x1xf32> -> vector<4x16x18xf32>
    %c0_154 = arith.constant 0 : index
    %c1_155 = arith.constant 1 : index
    %c0_156 = arith.constant 0 : index
    %394 = vector.load %arg6[%c0_154, %c1_155, %c0_156] : memref<4x18x18xf32, #tpu.memory_space<vmem>>, vector<4x16x18xf32>
    tpu.vector_store %arg6[%c0_154, %c1_155, %c0_156], %393 {strides = array<i32>} : memref<4x18x18xf32, #tpu.memory_space<vmem>>, vector<4x16x18xf32>,
    %c0_157 = arith.constant 0 : index
    %c0_158 = arith.constant 0 : index
    %c0_159 = arith.constant 0 : index
    %395 = vector.load %arg6[%c0_157, %c0_158, %c0_159] : memref<4x18x18xf32, #tpu.memory_space<vmem>>, vector<1x16x16xf32>
    %396 = vector.shape_cast %395 : vector<1x16x16xf32> to vector<16x16xf32>
    %397 = vector.extract_strided_slice %0 {offsets = [0, 0], sizes = [1, 1], strides = [1, 1]} : vector<4x9xf32> to vector<1x1xf32>
    %398 = vector.broadcast %397 : vector<1x1xf32> to vector<16x16xf32>
    %399 = arith.mulf %396, %398 : vector<16x16xf32>
    %c0_160 = arith.constant 0 : index
    %c0_161 = arith.constant 0 : index
    %c1_162 = arith.constant 1 : index
    %400 = vector.load %arg6[%c0_160, %c0_161, %c1_162] : memref<4x18x18xf32, #tpu.memory_space<vmem>>, vector<1x16x16xf32>
    %401 = vector.shape_cast %400 : vector<1x16x16xf32> to vector<16x16xf32>
    %402 = vector.extract_strided_slice %0 {offsets = [0, 1], sizes = [1, 1], strides = [1, 1]} : vector<4x9xf32> to vector<1x1xf32>
    %403 = vector.broadcast %402 : vector<1x1xf32> to vector<16x16xf32>
    %404 = arith.mulf %401, %403 : vector<16x16xf32>
    %405 = arith.addf %399, %404 : vector<16x16xf32>
    %c0_163 = arith.constant 0 : index
    %c0_164 = arith.constant 0 : index
    %c2_165 = arith.constant 2 : index
    %406 = vector.load %arg6[%c0_163, %c0_164, %c2_165] : memref<4x18x18xf32, #tpu.memory_space<vmem>>, vector<1x16x16xf32>
    %407 = vector.shape_cast %406 : vector<1x16x16xf32> to vector<16x16xf32>
    %408 = vector.extract_strided_slice %0 {offsets = [0, 2], sizes = [1, 1], strides = [1, 1]} : vector<4x9xf32> to vector<1x1xf32>
    %409 = vector.broadcast %408 : vector<1x1xf32> to vector<16x16xf32>
    %410 = arith.mulf %407, %409 : vector<16x16xf32>
    %411 = arith.addf %405, %410 : vector<16x16xf32>
    %c0_166 = arith.constant 0 : index
    %c1_167 = arith.constant 1 : index
    %c0_168 = arith.constant 0 : index
    %412 = vector.load %arg6[%c0_166, %c1_167, %c0_168] : memref<4x18x18xf32, #tpu.memory_space<vmem>>, vector<1x16x16xf32>
    %413 = vector.shape_cast %412 : vector<1x16x16xf32> to vector<16x16xf32>
    %414 = vector.extract_strided_slice %0 {offsets = [0, 3], sizes = [1, 1], strides = [1, 1]} : vector<4x9xf32> to vector<1x1xf32>
    %415 = vector.broadcast %414 : vector<1x1xf32> to vector<16x16xf32>
    %416 = arith.mulf %413, %415 : vector<16x16xf32>
    %417 = arith.addf %411, %416 : vector<16x16xf32>
    %c0_169 = arith.constant 0 : index
    %c1_170 = arith.constant 1 : index
    %c1_171 = arith.constant 1 : index
    %418 = vector.load %arg6[%c0_169, %c1_170, %c1_171] : memref<4x18x18xf32, #tpu.memory_space<vmem>>, vector<1x16x16xf32>
    %419 = vector.shape_cast %418 : vector<1x16x16xf32> to vector<16x16xf32>
    %420 = vector.extract_strided_slice %0 {offsets = [0, 4], sizes = [1, 1], strides = [1, 1]} : vector<4x9xf32> to vector<1x1xf32>
    %421 = vector.broadcast %420 : vector<1x1xf32> to vector<16x16xf32>
    %422 = arith.mulf %419, %421 : vector<16x16xf32>
    %423 = arith.addf %417, %422 : vector<16x16xf32>
    %c0_172 = arith.constant 0 : index
    %c1_173 = arith.constant 1 : index
    %c2_174 = arith.constant 2 : index
    %424 = vector.load %arg6[%c0_172, %c1_173, %c2_174] : memref<4x18x18xf32, #tpu.memory_space<vmem>>, vector<1x16x16xf32>
    %425 = vector.shape_cast %424 : vector<1x16x16xf32> to vector<16x16xf32>
    %426 = vector.extract_strided_slice %0 {offsets = [0, 5], sizes = [1, 1], strides = [1, 1]} : vector<4x9xf32> to vector<1x1xf32>
    %427 = vector.broadcast %426 : vector<1x1xf32> to vector<16x16xf32>
    %428 = arith.mulf %425, %427 : vector<16x16xf32>
    %429 = arith.addf %423, %428 : vector<16x16xf32>
    %c0_175 = arith.constant 0 : index
    %c2_176 = arith.constant 2 : index
    %c0_177 = arith.constant 0 : index
    %430 = vector.load %arg6[%c0_175, %c2_176, %c0_177] : memref<4x18x18xf32, #tpu.memory_space<vmem>>, vector<1x16x16xf32>
    %431 = vector.shape_cast %430 : vector<1x16x16xf32> to vector<16x16xf32>
    %432 = vector.extract_strided_slice %0 {offsets = [0, 6], sizes = [1, 1], strides = [1, 1]} : vector<4x9xf32> to vector<1x1xf32>
    %433 = vector.broadcast %432 : vector<1x1xf32> to vector<16x16xf32>
    %434 = arith.mulf %431, %433 : vector<16x16xf32>
    %435 = arith.addf %429, %434 : vector<16x16xf32>
    %c0_178 = arith.constant 0 : index
    %c2_179 = arith.constant 2 : index
    %c1_180 = arith.constant 1 : index
    %436 = vector.load %arg6[%c0_178, %c2_179, %c1_180] : memref<4x18x18xf32, #tpu.memory_space<vmem>>, vector<1x16x16xf32>
    %437 = vector.shape_cast %436 : vector<1x16x16xf32> to vector<16x16xf32>
    %438 = vector.extract_strided_slice %0 {offsets = [0, 7], sizes = [1, 1], strides = [1, 1]} : vector<4x9xf32> to vector<1x1xf32>
    %439 = vector.broadcast %438 : vector<1x1xf32> to vector<16x16xf32>
    %440 = arith.mulf %437, %439 : vector<16x16xf32>
    %441 = arith.addf %435, %440 : vector<16x16xf32>
    %c0_181 = arith.constant 0 : index
    %c2_182 = arith.constant 2 : index
    %c2_183 = arith.constant 2 : index
    %442 = vector.load %arg6[%c0_181, %c2_182, %c2_183] : memref<4x18x18xf32, #tpu.memory_space<vmem>>, vector<1x16x16xf32>
    %443 = vector.shape_cast %442 : vector<1x16x16xf32> to vector<16x16xf32>
    %444 = vector.extract_strided_slice %0 {offsets = [0, 8], sizes = [1, 1], strides = [1, 1]} : vector<4x9xf32> to vector<1x1xf32>
    %445 = vector.broadcast %444 : vector<1x1xf32> to vector<16x16xf32>
    %446 = arith.mulf %443, %445 : vector<16x16xf32>
    %447 = arith.addf %441, %446 : vector<16x16xf32>
    %c1_184 = arith.constant 1 : index
    %c0_185 = arith.constant 0 : index
    %c0_186 = arith.constant 0 : index
    %448 = vector.load %arg6[%c1_184, %c0_185, %c0_186] : memref<4x18x18xf32, #tpu.memory_space<vmem>>, vector<1x16x16xf32>
    %449 = vector.shape_cast %448 : vector<1x16x16xf32> to vector<16x16xf32>
    %450 = vector.extract_strided_slice %0 {offsets = [1, 0], sizes = [1, 1], strides = [1, 1]} : vector<4x9xf32> to vector<1x1xf32>
    %451 = vector.broadcast %450 : vector<1x1xf32> to vector<16x16xf32>
    %452 = arith.mulf %449, %451 : vector<16x16xf32>
    %c1_187 = arith.constant 1 : index
    %c0_188 = arith.constant 0 : index
    %c1_189 = arith.constant 1 : index
    %453 = vector.load %arg6[%c1_187, %c0_188, %c1_189] : memref<4x18x18xf32, #tpu.memory_space<vmem>>, vector<1x16x16xf32>
    %454 = vector.shape_cast %453 : vector<1x16x16xf32> to vector<16x16xf32>
    %455 = vector.extract_strided_slice %0 {offsets = [1, 1], sizes = [1, 1], strides = [1, 1]} : vector<4x9xf32> to vector<1x1xf32>
    %456 = vector.broadcast %455 : vector<1x1xf32> to vector<16x16xf32>
    %457 = arith.mulf %454, %456 : vector<16x16xf32>
    %458 = arith.addf %452, %457 : vector<16x16xf32>
    %c1_190 = arith.constant 1 : index
    %c0_191 = arith.constant 0 : index
    %c2_192 = arith.constant 2 : index
    %459 = vector.load %arg6[%c1_190, %c0_191, %c2_192] : memref<4x18x18xf32, #tpu.memory_space<vmem>>, vector<1x16x16xf32>
    %460 = vector.shape_cast %459 : vector<1x16x16xf32> to vector<16x16xf32>
    %461 = vector.extract_strided_slice %0 {offsets = [1, 2], sizes = [1, 1], strides = [1, 1]} : vector<4x9xf32> to vector<1x1xf32>
    %462 = vector.broadcast %461 : vector<1x1xf32> to vector<16x16xf32>
    %463 = arith.mulf %460, %462 : vector<16x16xf32>
    %464 = arith.addf %458, %463 : vector<16x16xf32>
    %c1_193 = arith.constant 1 : index
    %c1_194 = arith.constant 1 : index
    %c0_195 = arith.constant 0 : index
    %465 = vector.load %arg6[%c1_193, %c1_194, %c0_195] : memref<4x18x18xf32, #tpu.memory_space<vmem>>, vector<1x16x16xf32>
    %466 = vector.shape_cast %465 : vector<1x16x16xf32> to vector<16x16xf32>
    %467 = vector.extract_strided_slice %0 {offsets = [1, 3], sizes = [1, 1], strides = [1, 1]} : vector<4x9xf32> to vector<1x1xf32>
    %468 = vector.broadcast %467 : vector<1x1xf32> to vector<16x16xf32>
    %469 = arith.mulf %466, %468 : vector<16x16xf32>
    %470 = arith.addf %464, %469 : vector<16x16xf32>
    %c1_196 = arith.constant 1 : index
    %c1_197 = arith.constant 1 : index
    %c1_198 = arith.constant 1 : index
    %471 = vector.load %arg6[%c1_196, %c1_197, %c1_198] : memref<4x18x18xf32, #tpu.memory_space<vmem>>, vector<1x16x16xf32>
    %472 = vector.shape_cast %471 : vector<1x16x16xf32> to vector<16x16xf32>
    %473 = vector.extract_strided_slice %0 {offsets = [1, 4], sizes = [1, 1], strides = [1, 1]} : vector<4x9xf32> to vector<1x1xf32>
    %474 = vector.broadcast %473 : vector<1x1xf32> to vector<16x16xf32>
    %475 = arith.mulf %472, %474 : vector<16x16xf32>
    %476 = arith.addf %470, %475 : vector<16x16xf32>
    %c1_199 = arith.constant 1 : index
    %c1_200 = arith.constant 1 : index
    %c2_201 = arith.constant 2 : index
    %477 = vector.load %arg6[%c1_199, %c1_200, %c2_201] : memref<4x18x18xf32, #tpu.memory_space<vmem>>, vector<1x16x16xf32>
    %478 = vector.shape_cast %477 : vector<1x16x16xf32> to vector<16x16xf32>
    %479 = vector.extract_strided_slice %0 {offsets = [1, 5], sizes = [1, 1], strides = [1, 1]} : vector<4x9xf32> to vector<1x1xf32>
    %480 = vector.broadcast %479 : vector<1x1xf32> to vector<16x16xf32>
    %481 = arith.mulf %478, %480 : vector<16x16xf32>
    %482 = arith.addf %476, %481 : vector<16x16xf32>
    %c1_202 = arith.constant 1 : index
    %c2_203 = arith.constant 2 : index
    %c0_204 = arith.constant 0 : index
    %483 = vector.load %arg6[%c1_202, %c2_203, %c0_204] : memref<4x18x18xf32, #tpu.memory_space<vmem>>, vector<1x16x16xf32>
    %484 = vector.shape_cast %483 : vector<1x16x16xf32> to vector<16x16xf32>
    %485 = vector.extract_strided_slice %0 {offsets = [1, 6], sizes = [1, 1], strides = [1, 1]} : vector<4x9xf32> to vector<1x1xf32>
    %486 = vector.broadcast %485 : vector<1x1xf32> to vector<16x16xf32>
    %487 = arith.mulf %484, %486 : vector<16x16xf32>
    %488 = arith.addf %482, %487 : vector<16x16xf32>
    %c1_205 = arith.constant 1 : index
    %c2_206 = arith.constant 2 : index
    %c1_207 = arith.constant 1 : index
    %489 = vector.load %arg6[%c1_205, %c2_206, %c1_207] : memref<4x18x18xf32, #tpu.memory_space<vmem>>, vector<1x16x16xf32>
    %490 = vector.shape_cast %489 : vector<1x16x16xf32> to vector<16x16xf32>
    %491 = vector.extract_strided_slice %0 {offsets = [1, 7], sizes = [1, 1], strides = [1, 1]} : vector<4x9xf32> to vector<1x1xf32>
    %492 = vector.broadcast %491 : vector<1x1xf32> to vector<16x16xf32>
    %493 = arith.mulf %490, %492 : vector<16x16xf32>
    %494 = arith.addf %488, %493 : vector<16x16xf32>
    %c1_208 = arith.constant 1 : index
    %c2_209 = arith.constant 2 : index
    %c2_210 = arith.constant 2 : index
    %495 = vector.load %arg6[%c1_208, %c2_209, %c2_210] : memref<4x18x18xf32, #tpu.memory_space<vmem>>, vector<1x16x16xf32>
    %496 = vector.shape_cast %495 : vector<1x16x16xf32> to vector<16x16xf32>
    %497 = vector.extract_strided_slice %0 {offsets = [1, 8], sizes = [1, 1], strides = [1, 1]} : vector<4x9xf32> to vector<1x1xf32>
    %498 = vector.broadcast %497 : vector<1x1xf32> to vector<16x16xf32>
    %499 = arith.mulf %496, %498 : vector<16x16xf32>
    %500 = arith.addf %494, %499 : vector<16x16xf32>
    %c2_211 = arith.constant 2 : index
    %c0_212 = arith.constant 0 : index
    %c0_213 = arith.constant 0 : index
    %501 = vector.load %arg6[%c2_211, %c0_212, %c0_213] : memref<4x18x18xf32, #tpu.memory_space<vmem>>, vector<1x16x16xf32>
    %502 = vector.shape_cast %501 : vector<1x16x16xf32> to vector<16x16xf32>
    %503 = vector.extract_strided_slice %0 {offsets = [2, 0], sizes = [1, 1], strides = [1, 1]} : vector<4x9xf32> to vector<1x1xf32>
    %504 = vector.broadcast %503 : vector<1x1xf32> to vector<16x16xf32>
    %505 = arith.mulf %502, %504 : vector<16x16xf32>
    %c2_214 = arith.constant 2 : index
    %c0_215 = arith.constant 0 : index
    %c1_216 = arith.constant 1 : index
    %506 = vector.load %arg6[%c2_214, %c0_215, %c1_216] : memref<4x18x18xf32, #tpu.memory_space<vmem>>, vector<1x16x16xf32>
    %507 = vector.shape_cast %506 : vector<1x16x16xf32> to vector<16x16xf32>
    %508 = vector.extract_strided_slice %0 {offsets = [2, 1], sizes = [1, 1], strides = [1, 1]} : vector<4x9xf32> to vector<1x1xf32>
    %509 = vector.broadcast %508 : vector<1x1xf32> to vector<16x16xf32>
    %510 = arith.mulf %507, %509 : vector<16x16xf32>
    %511 = arith.addf %505, %510 : vector<16x16xf32>
    %c2_217 = arith.constant 2 : index
    %c0_218 = arith.constant 0 : index
    %c2_219 = arith.constant 2 : index
    %512 = vector.load %arg6[%c2_217, %c0_218, %c2_219] : memref<4x18x18xf32, #tpu.memory_space<vmem>>, vector<1x16x16xf32>
    %513 = vector.shape_cast %512 : vector<1x16x16xf32> to vector<16x16xf32>
    %514 = vector.extract_strided_slice %0 {offsets = [2, 2], sizes = [1, 1], strides = [1, 1]} : vector<4x9xf32> to vector<1x1xf32>
    %515 = vector.broadcast %514 : vector<1x1xf32> to vector<16x16xf32>
    %516 = arith.mulf %513, %515 : vector<16x16xf32>
    %517 = arith.addf %511, %516 : vector<16x16xf32>
    %c2_220 = arith.constant 2 : index
    %c1_221 = arith.constant 1 : index
    %c0_222 = arith.constant 0 : index
    %518 = vector.load %arg6[%c2_220, %c1_221, %c0_222] : memref<4x18x18xf32, #tpu.memory_space<vmem>>, vector<1x16x16xf32>
    %519 = vector.shape_cast %518 : vector<1x16x16xf32> to vector<16x16xf32>
    %520 = vector.extract_strided_slice %0 {offsets = [2, 3], sizes = [1, 1], strides = [1, 1]} : vector<4x9xf32> to vector<1x1xf32>
    %521 = vector.broadcast %520 : vector<1x1xf32> to vector<16x16xf32>
    %522 = arith.mulf %519, %521 : vector<16x16xf32>
    %523 = arith.addf %517, %522 : vector<16x16xf32>
    %c2_223 = arith.constant 2 : index
    %c1_224 = arith.constant 1 : index
    %c1_225 = arith.constant 1 : index
    %524 = vector.load %arg6[%c2_223, %c1_224, %c1_225] : memref<4x18x18xf32, #tpu.memory_space<vmem>>, vector<1x16x16xf32>
    %525 = vector.shape_cast %524 : vector<1x16x16xf32> to vector<16x16xf32>
    %526 = vector.extract_strided_slice %0 {offsets = [2, 4], sizes = [1, 1], strides = [1, 1]} : vector<4x9xf32> to vector<1x1xf32>
    %527 = vector.broadcast %526 : vector<1x1xf32> to vector<16x16xf32>
    %528 = arith.mulf %525, %527 : vector<16x16xf32>
    %529 = arith.addf %523, %528 : vector<16x16xf32>
    %c2_226 = arith.constant 2 : index
    %c1_227 = arith.constant 1 : index
    %c2_228 = arith.constant 2 : index
    %530 = vector.load %arg6[%c2_226, %c1_227, %c2_228] : memref<4x18x18xf32, #tpu.memory_space<vmem>>, vector<1x16x16xf32>
    %531 = vector.shape_cast %530 : vector<1x16x16xf32> to vector<16x16xf32>
    %532 = vector.extract_strided_slice %0 {offsets = [2, 5], sizes = [1, 1], strides = [1, 1]} : vector<4x9xf32> to vector<1x1xf32>
    %533 = vector.broadcast %532 : vector<1x1xf32> to vector<16x16xf32>
    %534 = arith.mulf %531, %533 : vector<16x16xf32>
    %535 = arith.addf %529, %534 : vector<16x16xf32>
    %c2_229 = arith.constant 2 : index
    %c2_230 = arith.constant 2 : index
    %c0_231 = arith.constant 0 : index
    %536 = vector.load %arg6[%c2_229, %c2_230, %c0_231] : memref<4x18x18xf32, #tpu.memory_space<vmem>>, vector<1x16x16xf32>
    %537 = vector.shape_cast %536 : vector<1x16x16xf32> to vector<16x16xf32>
    %538 = vector.extract_strided_slice %0 {offsets = [2, 6], sizes = [1, 1], strides = [1, 1]} : vector<4x9xf32> to vector<1x1xf32>
    %539 = vector.broadcast %538 : vector<1x1xf32> to vector<16x16xf32>
    %540 = arith.mulf %537, %539 : vector<16x16xf32>
    %541 = arith.addf %535, %540 : vector<16x16xf32>
    %c2_232 = arith.constant 2 : index
    %c2_233 = arith.constant 2 : index
    %c1_234 = arith.constant 1 : index
    %542 = vector.load %arg6[%c2_232, %c2_233, %c1_234] : memref<4x18x18xf32, #tpu.memory_space<vmem>>, vector<1x16x16xf32>
    %543 = vector.shape_cast %542 : vector<1x16x16xf32> to vector<16x16xf32>
    %544 = vector.extract_strided_slice %0 {offsets = [2, 7], sizes = [1, 1], strides = [1, 1]} : vector<4x9xf32> to vector<1x1xf32>
    %545 = vector.broadcast %544 : vector<1x1xf32> to vector<16x16xf32>
    %546 = arith.mulf %543, %545 : vector<16x16xf32>
    %547 = arith.addf %541, %546 : vector<16x16xf32>
    %c2_235 = arith.constant 2 : index
    %c2_236 = arith.constant 2 : index
    %c2_237 = arith.constant 2 : index
    %548 = vector.load %arg6[%c2_235, %c2_236, %c2_237] : memref<4x18x18xf32, #tpu.memory_space<vmem>>, vector<1x16x16xf32>
    %549 = vector.shape_cast %548 : vector<1x16x16xf32> to vector<16x16xf32>
    %550 = vector.extract_strided_slice %0 {offsets = [2, 8], sizes = [1, 1], strides = [1, 1]} : vector<4x9xf32> to vector<1x1xf32>
    %551 = vector.broadcast %550 : vector<1x1xf32> to vector<16x16xf32>
    %552 = arith.mulf %549, %551 : vector<16x16xf32>
    %553 = arith.addf %547, %552 : vector<16x16xf32>
    %c3_238 = arith.constant 3 : index
    %c0_239 = arith.constant 0 : index
    %c0_240 = arith.constant 0 : index
    %554 = vector.load %arg6[%c3_238, %c0_239, %c0_240] : memref<4x18x18xf32, #tpu.memory_space<vmem>>, vector<1x16x16xf32>
    %555 = vector.shape_cast %554 : vector<1x16x16xf32> to vector<16x16xf32>
    %556 = vector.extract_strided_slice %0 {offsets = [3, 0], sizes = [1, 1], strides = [1, 1]} : vector<4x9xf32> to vector<1x1xf32>
    %557 = vector.broadcast %556 : vector<1x1xf32> to vector<16x16xf32>
    %558 = arith.mulf %555, %557 : vector<16x16xf32>
    %c3_241 = arith.constant 3 : index
    %c0_242 = arith.constant 0 : index
    %c1_243 = arith.constant 1 : index
    %559 = vector.load %arg6[%c3_241, %c0_242, %c1_243] : memref<4x18x18xf32, #tpu.memory_space<vmem>>, vector<1x16x16xf32>
    %560 = vector.shape_cast %559 : vector<1x16x16xf32> to vector<16x16xf32>
    %561 = vector.extract_strided_slice %0 {offsets = [3, 1], sizes = [1, 1], strides = [1, 1]} : vector<4x9xf32> to vector<1x1xf32>
    %562 = vector.broadcast %561 : vector<1x1xf32> to vector<16x16xf32>
    %563 = arith.mulf %560, %562 : vector<16x16xf32>
    %564 = arith.addf %558, %563 : vector<16x16xf32>
    %c3_244 = arith.constant 3 : index
    %c0_245 = arith.constant 0 : index
    %c2_246 = arith.constant 2 : index
    %565 = vector.load %arg6[%c3_244, %c0_245, %c2_246] : memref<4x18x18xf32, #tpu.memory_space<vmem>>, vector<1x16x16xf32>
    %566 = vector.shape_cast %565 : vector<1x16x16xf32> to vector<16x16xf32>
    %567 = vector.extract_strided_slice %0 {offsets = [3, 2], sizes = [1, 1], strides = [1, 1]} : vector<4x9xf32> to vector<1x1xf32>
    %568 = vector.broadcast %567 : vector<1x1xf32> to vector<16x16xf32>
    %569 = arith.mulf %566, %568 : vector<16x16xf32>
    %570 = arith.addf %564, %569 : vector<16x16xf32>
    %c3_247 = arith.constant 3 : index
    %c1_248 = arith.constant 1 : index
    %c0_249 = arith.constant 0 : index
    %571 = vector.load %arg6[%c3_247, %c1_248, %c0_249] : memref<4x18x18xf32, #tpu.memory_space<vmem>>, vector<1x16x16xf32>
    %572 = vector.shape_cast %571 : vector<1x16x16xf32> to vector<16x16xf32>
    %573 = vector.extract_strided_slice %0 {offsets = [3, 3], sizes = [1, 1], strides = [1, 1]} : vector<4x9xf32> to vector<1x1xf32>
    %574 = vector.broadcast %573 : vector<1x1xf32> to vector<16x16xf32>
    %575 = arith.mulf %572, %574 : vector<16x16xf32>
    %576 = arith.addf %570, %575 : vector<16x16xf32>
    %c3_250 = arith.constant 3 : index
    %c1_251 = arith.constant 1 : index
    %c1_252 = arith.constant 1 : index
    %577 = vector.load %arg6[%c3_250, %c1_251, %c1_252] : memref<4x18x18xf32, #tpu.memory_space<vmem>>, vector<1x16x16xf32>
    %578 = vector.shape_cast %577 : vector<1x16x16xf32> to vector<16x16xf32>
    %579 = vector.extract_strided_slice %0 {offsets = [3, 4], sizes = [1, 1], strides = [1, 1]} : vector<4x9xf32> to vector<1x1xf32>
    %580 = vector.broadcast %579 : vector<1x1xf32> to vector<16x16xf32>
    %581 = arith.mulf %578, %580 : vector<16x16xf32>
    %582 = arith.addf %576, %581 : vector<16x16xf32>
    %c3_253 = arith.constant 3 : index
    %c1_254 = arith.constant 1 : index
    %c2_255 = arith.constant 2 : index
    %583 = vector.load %arg6[%c3_253, %c1_254, %c2_255] : memref<4x18x18xf32, #tpu.memory_space<vmem>>, vector<1x16x16xf32>
    %584 = vector.shape_cast %583 : vector<1x16x16xf32> to vector<16x16xf32>
    %585 = vector.extract_strided_slice %0 {offsets = [3, 5], sizes = [1, 1], strides = [1, 1]} : vector<4x9xf32> to vector<1x1xf32>
    %586 = vector.broadcast %585 : vector<1x1xf32> to vector<16x16xf32>
    %587 = arith.mulf %584, %586 : vector<16x16xf32>
    %588 = arith.addf %582, %587 : vector<16x16xf32>
    %c3_256 = arith.constant 3 : index
    %c2_257 = arith.constant 2 : index
    %c0_258 = arith.constant 0 : index
    %589 = vector.load %arg6[%c3_256, %c2_257, %c0_258] : memref<4x18x18xf32, #tpu.memory_space<vmem>>, vector<1x16x16xf32>
    %590 = vector.shape_cast %589 : vector<1x16x16xf32> to vector<16x16xf32>
    %591 = vector.extract_strided_slice %0 {offsets = [3, 6], sizes = [1, 1], strides = [1, 1]} : vector<4x9xf32> to vector<1x1xf32>
    %592 = vector.broadcast %591 : vector<1x1xf32> to vector<16x16xf32>
    %593 = arith.mulf %590, %592 : vector<16x16xf32>
    %594 = arith.addf %588, %593 : vector<16x16xf32>
    %c3_259 = arith.constant 3 : index
    %c2_260 = arith.constant 2 : index
    %c1_261 = arith.constant 1 : index
    %595 = vector.load %arg6[%c3_259, %c2_260, %c1_261] : memref<4x18x18xf32, #tpu.memory_space<vmem>>, vector<1x16x16xf32>
    %596 = vector.shape_cast %595 : vector<1x16x16xf32> to vector<16x16xf32>
    %597 = vector.extract_strided_slice %0 {offsets = [3, 7], sizes = [1, 1], strides = [1, 1]} : vector<4x9xf32> to vector<1x1xf32>
    %598 = vector.broadcast %597 : vector<1x1xf32> to vector<16x16xf32>
    %599 = arith.mulf %596, %598 : vector<16x16xf32>
    %600 = arith.addf %594, %599 : vector<16x16xf32>
    %c3_262 = arith.constant 3 : index
    %c2_263 = arith.constant 2 : index
    %c2_264 = arith.constant 2 : index
    %601 = vector.load %arg6[%c3_262, %c2_263, %c2_264] : memref<4x18x18xf32, #tpu.memory_space<vmem>>, vector<1x16x16xf32>
    %602 = vector.shape_cast %601 : vector<1x16x16xf32> to vector<16x16xf32>
    %603 = vector.extract_strided_slice %0 {offsets = [3, 8], sizes = [1, 1], strides = [1, 1]} : vector<4x9xf32> to vector<1x1xf32>
    %604 = vector.broadcast %603 : vector<1x1xf32> to vector<16x16xf32>
    %605 = arith.mulf %602, %604 : vector<16x16xf32>
    %606 = arith.addf %600, %605 : vector<16x16xf32>
    %607 = vector.extract_strided_slice %1 {offsets = [0, 0], sizes = [1, 1], strides = [1, 1]} : vector<8x4xf32> to vector<1x1xf32>
    %608 = vector.broadcast %607 : vector<1x1xf32> to vector<16x16xf32>
    %609 = arith.mulf %447, %608 : vector<16x16xf32>
    %610 = vector.extract_strided_slice %1 {offsets = [0, 1], sizes = [1, 1], strides = [1, 1]} : vector<8x4xf32> to vector<1x1xf32>
    %611 = vector.broadcast %610 : vector<1x1xf32> to vector<16x16xf32>
    %612 = arith.mulf %500, %611 : vector<16x16xf32>
    %613 = arith.addf %609, %612 : vector<16x16xf32>
    %614 = vector.extract_strided_slice %1 {offsets = [0, 2], sizes = [1, 1], strides = [1, 1]} : vector<8x4xf32> to vector<1x1xf32>
    %615 = vector.broadcast %614 : vector<1x1xf32> to vector<16x16xf32>
    %616 = arith.mulf %553, %615 : vector<16x16xf32>
    %617 = arith.addf %613, %616 : vector<16x16xf32>
    %618 = vector.extract_strided_slice %1 {offsets = [0, 3], sizes = [1, 1], strides = [1, 1]} : vector<8x4xf32> to vector<1x1xf32>
    %619 = vector.broadcast %618 : vector<1x1xf32> to vector<16x16xf32>
    %620 = arith.mulf %606, %619 : vector<16x16xf32>
    %621 = arith.addf %617, %620 : vector<16x16xf32>
    %622 = vector.extract_strided_slice %2 {offsets = [0, 0], sizes = [1, 1], strides = [1, 1]} : vector<8x1xf32> to vector<1x1xf32>
    %623 = vector.broadcast %622 : vector<1x1xf32> to vector<16x16xf32>
    %624 = arith.addf %621, %623 : vector<16x16xf32>
    %c1_265 = arith.constant 1 : index
    %c0_266 = arith.constant 0 : index
    %c0_267 = arith.constant 0 : index
    %c0_268 = arith.constant 0 : index
    %625 = vector.load %arg5[%c1_265, %c0_266, %c0_267, %c0_268] : memref<2x8x16x16xf32, #tpu.memory_space<vmem>>, vector<1x1x16x16xf32>
    %626 = vector.shape_cast %625 : vector<1x1x16x16xf32> to vector<16x16xf32>
    %627 = vector.shape_cast %624 : vector<16x16xf32> to vector<1x1x16x16xf32>
    tpu.vector_store %arg5[%c1_265, %c0_266, %c0_267, %c0_268], %627 {strides = array<i32>} : memref<2x8x16x16xf32, #tpu.memory_space<vmem>>, vector<1x1x16x16xf32>,
    %628 = vector.extract_strided_slice %1 {offsets = [1, 0], sizes = [1, 1], strides = [1, 1]} : vector<8x4xf32> to vector<1x1xf32>
    %629 = vector.broadcast %628 : vector<1x1xf32> to vector<16x16xf32>
    %630 = arith.mulf %447, %629 : vector<16x16xf32>
    %631 = vector.extract_strided_slice %1 {offsets = [1, 1], sizes = [1, 1], strides = [1, 1]} : vector<8x4xf32> to vector<1x1xf32>
    %632 = vector.broadcast %631 : vector<1x1xf32> to vector<16x16xf32>
    %633 = arith.mulf %500, %632 : vector<16x16xf32>
    %634 = arith.addf %630, %633 : vector<16x16xf32>
    %635 = vector.extract_strided_slice %1 {offsets = [1, 2], sizes = [1, 1], strides = [1, 1]} : vector<8x4xf32> to vector<1x1xf32>
    %636 = vector.broadcast %635 : vector<1x1xf32> to vector<16x16xf32>
    %637 = arith.mulf %553, %636 : vector<16x16xf32>
    %638 = arith.addf %634, %637 : vector<16x16xf32>
    %639 = vector.extract_strided_slice %1 {offsets = [1, 3], sizes = [1, 1], strides = [1, 1]} : vector<8x4xf32> to vector<1x1xf32>
    %640 = vector.broadcast %639 : vector<1x1xf32> to vector<16x16xf32>
    %641 = arith.mulf %606, %640 : vector<16x16xf32>
    %642 = arith.addf %638, %641 : vector<16x16xf32>
    %643 = vector.extract_strided_slice %2 {offsets = [1, 0], sizes = [1, 1], strides = [1, 1]} : vector<8x1xf32> to vector<1x1xf32>
    %644 = vector.broadcast %643 : vector<1x1xf32> to vector<16x16xf32>
    %645 = arith.addf %642, %644 : vector<16x16xf32>
    %c1_269 = arith.constant 1 : index
    %c1_270 = arith.constant 1 : index
    %c0_271 = arith.constant 0 : index
    %c0_272 = arith.constant 0 : index
    %646 = vector.load %arg5[%c1_269, %c1_270, %c0_271, %c0_272] : memref<2x8x16x16xf32, #tpu.memory_space<vmem>>, vector<1x1x16x16xf32>
    %647 = vector.shape_cast %646 : vector<1x1x16x16xf32> to vector<16x16xf32>
    %648 = vector.shape_cast %645 : vector<16x16xf32> to vector<1x1x16x16xf32>
    tpu.vector_store %arg5[%c1_269, %c1_270, %c0_271, %c0_272], %648 {strides = array<i32>} : memref<2x8x16x16xf32, #tpu.memory_space<vmem>>, vector<1x1x16x16xf32>,
    %649 = vector.extract_strided_slice %1 {offsets = [2, 0], sizes = [1, 1], strides = [1, 1]} : vector<8x4xf32> to vector<1x1xf32>
    %650 = vector.broadcast %649 : vector<1x1xf32> to vector<16x16xf32>
    %651 = arith.mulf %447, %650 : vector<16x16xf32>
    %652 = vector.extract_strided_slice %1 {offsets = [2, 1], sizes = [1, 1], strides = [1, 1]} : vector<8x4xf32> to vector<1x1xf32>
    %653 = vector.broadcast %652 : vector<1x1xf32> to vector<16x16xf32>
    %654 = arith.mulf %500, %653 : vector<16x16xf32>
    %655 = arith.addf %651, %654 : vector<16x16xf32>
    %656 = vector.extract_strided_slice %1 {offsets = [2, 2], sizes = [1, 1], strides = [1, 1]} : vector<8x4xf32> to vector<1x1xf32>
    %657 = vector.broadcast %656 : vector<1x1xf32> to vector<16x16xf32>
    %658 = arith.mulf %553, %657 : vector<16x16xf32>
    %659 = arith.addf %655, %658 : vector<16x16xf32>
    %660 = vector.extract_strided_slice %1 {offsets = [2, 3], sizes = [1, 1], strides = [1, 1]} : vector<8x4xf32> to vector<1x1xf32>
    %661 = vector.broadcast %660 : vector<1x1xf32> to vector<16x16xf32>
    %662 = arith.mulf %606, %661 : vector<16x16xf32>
    %663 = arith.addf %659, %662 : vector<16x16xf32>
    %664 = vector.extract_strided_slice %2 {offsets = [2, 0], sizes = [1, 1], strides = [1, 1]} : vector<8x1xf32> to vector<1x1xf32>
    %665 = vector.broadcast %664 : vector<1x1xf32> to vector<16x16xf32>
    %666 = arith.addf %663, %665 : vector<16x16xf32>
    %c1_273 = arith.constant 1 : index
    %c2_274 = arith.constant 2 : index
    %c0_275 = arith.constant 0 : index
    %c0_276 = arith.constant 0 : index
    %667 = vector.load %arg5[%c1_273, %c2_274, %c0_275, %c0_276] : memref<2x8x16x16xf32, #tpu.memory_space<vmem>>, vector<1x1x16x16xf32>
    %668 = vector.shape_cast %667 : vector<1x1x16x16xf32> to vector<16x16xf32>
    %669 = vector.shape_cast %666 : vector<16x16xf32> to vector<1x1x16x16xf32>
    tpu.vector_store %arg5[%c1_273, %c2_274, %c0_275, %c0_276], %669 {strides = array<i32>} : memref<2x8x16x16xf32, #tpu.memory_space<vmem>>, vector<1x1x16x16xf32>,
    %670 = vector.extract_strided_slice %1 {offsets = [3, 0], sizes = [1, 1], strides = [1, 1]} : vector<8x4xf32> to vector<1x1xf32>
    %671 = vector.broadcast %670 : vector<1x1xf32> to vector<16x16xf32>
    %672 = arith.mulf %447, %671 : vector<16x16xf32>
    %673 = vector.extract_strided_slice %1 {offsets = [3, 1], sizes = [1, 1], strides = [1, 1]} : vector<8x4xf32> to vector<1x1xf32>
    %674 = vector.broadcast %673 : vector<1x1xf32> to vector<16x16xf32>
    %675 = arith.mulf %500, %674 : vector<16x16xf32>
    %676 = arith.addf %672, %675 : vector<16x16xf32>
    %677 = vector.extract_strided_slice %1 {offsets = [3, 2], sizes = [1, 1], strides = [1, 1]} : vector<8x4xf32> to vector<1x1xf32>
    %678 = vector.broadcast %677 : vector<1x1xf32> to vector<16x16xf32>
    %679 = arith.mulf %553, %678 : vector<16x16xf32>
    %680 = arith.addf %676, %679 : vector<16x16xf32>
    %681 = vector.extract_strided_slice %1 {offsets = [3, 3], sizes = [1, 1], strides = [1, 1]} : vector<8x4xf32> to vector<1x1xf32>
    %682 = vector.broadcast %681 : vector<1x1xf32> to vector<16x16xf32>
    %683 = arith.mulf %606, %682 : vector<16x16xf32>
    %684 = arith.addf %680, %683 : vector<16x16xf32>
    %685 = vector.extract_strided_slice %2 {offsets = [3, 0], sizes = [1, 1], strides = [1, 1]} : vector<8x1xf32> to vector<1x1xf32>
    %686 = vector.broadcast %685 : vector<1x1xf32> to vector<16x16xf32>
    %687 = arith.addf %684, %686 : vector<16x16xf32>
    %c1_277 = arith.constant 1 : index
    %c3_278 = arith.constant 3 : index
    %c0_279 = arith.constant 0 : index
    %c0_280 = arith.constant 0 : index
    %688 = vector.load %arg5[%c1_277, %c3_278, %c0_279, %c0_280] : memref<2x8x16x16xf32, #tpu.memory_space<vmem>>, vector<1x1x16x16xf32>
    %689 = vector.shape_cast %688 : vector<1x1x16x16xf32> to vector<16x16xf32>
    %690 = vector.shape_cast %687 : vector<16x16xf32> to vector<1x1x16x16xf32>
    tpu.vector_store %arg5[%c1_277, %c3_278, %c0_279, %c0_280], %690 {strides = array<i32>} : memref<2x8x16x16xf32, #tpu.memory_space<vmem>>, vector<1x1x16x16xf32>,
    %691 = vector.extract_strided_slice %1 {offsets = [4, 0], sizes = [1, 1], strides = [1, 1]} : vector<8x4xf32> to vector<1x1xf32>
    %692 = vector.broadcast %691 : vector<1x1xf32> to vector<16x16xf32>
    %693 = arith.mulf %447, %692 : vector<16x16xf32>
    %694 = vector.extract_strided_slice %1 {offsets = [4, 1], sizes = [1, 1], strides = [1, 1]} : vector<8x4xf32> to vector<1x1xf32>
    %695 = vector.broadcast %694 : vector<1x1xf32> to vector<16x16xf32>
    %696 = arith.mulf %500, %695 : vector<16x16xf32>
    %697 = arith.addf %693, %696 : vector<16x16xf32>
    %698 = vector.extract_strided_slice %1 {offsets = [4, 2], sizes = [1, 1], strides = [1, 1]} : vector<8x4xf32> to vector<1x1xf32>
    %699 = vector.broadcast %698 : vector<1x1xf32> to vector<16x16xf32>
    %700 = arith.mulf %553, %699 : vector<16x16xf32>
    %701 = arith.addf %697, %700 : vector<16x16xf32>
    %702 = vector.extract_strided_slice %1 {offsets = [4, 3], sizes = [1, 1], strides = [1, 1]} : vector<8x4xf32> to vector<1x1xf32>
    %703 = vector.broadcast %702 : vector<1x1xf32> to vector<16x16xf32>
    %704 = arith.mulf %606, %703 : vector<16x16xf32>
    %705 = arith.addf %701, %704 : vector<16x16xf32>
    %706 = vector.extract_strided_slice %2 {offsets = [4, 0], sizes = [1, 1], strides = [1, 1]} : vector<8x1xf32> to vector<1x1xf32>
    %707 = vector.broadcast %706 : vector<1x1xf32> to vector<16x16xf32>
    %708 = arith.addf %705, %707 : vector<16x16xf32>
    %c1_281 = arith.constant 1 : index
    %c4_282 = arith.constant 4 : index
    %c0_283 = arith.constant 0 : index
    %c0_284 = arith.constant 0 : index
    %709 = vector.load %arg5[%c1_281, %c4_282, %c0_283, %c0_284] : memref<2x8x16x16xf32, #tpu.memory_space<vmem>>, vector<1x1x16x16xf32>
    %710 = vector.shape_cast %709 : vector<1x1x16x16xf32> to vector<16x16xf32>
    %711 = vector.shape_cast %708 : vector<16x16xf32> to vector<1x1x16x16xf32>
    tpu.vector_store %arg5[%c1_281, %c4_282, %c0_283, %c0_284], %711 {strides = array<i32>} : memref<2x8x16x16xf32, #tpu.memory_space<vmem>>, vector<1x1x16x16xf32>,
    %712 = vector.extract_strided_slice %1 {offsets = [5, 0], sizes = [1, 1], strides = [1, 1]} : vector<8x4xf32> to vector<1x1xf32>
    %713 = vector.broadcast %712 : vector<1x1xf32> to vector<16x16xf32>
    %714 = arith.mulf %447, %713 : vector<16x16xf32>
    %715 = vector.extract_strided_slice %1 {offsets = [5, 1], sizes = [1, 1], strides = [1, 1]} : vector<8x4xf32> to vector<1x1xf32>
    %716 = vector.broadcast %715 : vector<1x1xf32> to vector<16x16xf32>
    %717 = arith.mulf %500, %716 : vector<16x16xf32>
    %718 = arith.addf %714, %717 : vector<16x16xf32>
    %719 = vector.extract_strided_slice %1 {offsets = [5, 2], sizes = [1, 1], strides = [1, 1]} : vector<8x4xf32> to vector<1x1xf32>
    %720 = vector.broadcast %719 : vector<1x1xf32> to vector<16x16xf32>
    %721 = arith.mulf %553, %720 : vector<16x16xf32>
    %722 = arith.addf %718, %721 : vector<16x16xf32>
    %723 = vector.extract_strided_slice %1 {offsets = [5, 3], sizes = [1, 1], strides = [1, 1]} : vector<8x4xf32> to vector<1x1xf32>
    %724 = vector.broadcast %723 : vector<1x1xf32> to vector<16x16xf32>
    %725 = arith.mulf %606, %724 : vector<16x16xf32>
    %726 = arith.addf %722, %725 : vector<16x16xf32>
    %727 = vector.extract_strided_slice %2 {offsets = [5, 0], sizes = [1, 1], strides = [1, 1]} : vector<8x1xf32> to vector<1x1xf32>
    %728 = vector.broadcast %727 : vector<1x1xf32> to vector<16x16xf32>
    %729 = arith.addf %726, %728 : vector<16x16xf32>
    %c1_285 = arith.constant 1 : index
    %c5_286 = arith.constant 5 : index
    %c0_287 = arith.constant 0 : index
    %c0_288 = arith.constant 0 : index
    %730 = vector.load %arg5[%c1_285, %c5_286, %c0_287, %c0_288] : memref<2x8x16x16xf32, #tpu.memory_space<vmem>>, vector<1x1x16x16xf32>
    %731 = vector.shape_cast %730 : vector<1x1x16x16xf32> to vector<16x16xf32>
    %732 = vector.shape_cast %729 : vector<16x16xf32> to vector<1x1x16x16xf32>
    tpu.vector_store %arg5[%c1_285, %c5_286, %c0_287, %c0_288], %732 {strides = array<i32>} : memref<2x8x16x16xf32, #tpu.memory_space<vmem>>, vector<1x1x16x16xf32>,
    %733 = vector.extract_strided_slice %1 {offsets = [6, 0], sizes = [1, 1], strides = [1, 1]} : vector<8x4xf32> to vector<1x1xf32>
    %734 = vector.broadcast %733 : vector<1x1xf32> to vector<16x16xf32>
    %735 = arith.mulf %447, %734 : vector<16x16xf32>
    %736 = vector.extract_strided_slice %1 {offsets = [6, 1], sizes = [1, 1], strides = [1, 1]} : vector<8x4xf32> to vector<1x1xf32>
    %737 = vector.broadcast %736 : vector<1x1xf32> to vector<16x16xf32>
    %738 = arith.mulf %500, %737 : vector<16x16xf32>
    %739 = arith.addf %735, %738 : vector<16x16xf32>
    %740 = vector.extract_strided_slice %1 {offsets = [6, 2], sizes = [1, 1], strides = [1, 1]} : vector<8x4xf32> to vector<1x1xf32>
    %741 = vector.broadcast %740 : vector<1x1xf32> to vector<16x16xf32>
    %742 = arith.mulf %553, %741 : vector<16x16xf32>
    %743 = arith.addf %739, %742 : vector<16x16xf32>
    %744 = vector.extract_strided_slice %1 {offsets = [6, 3], sizes = [1, 1], strides = [1, 1]} : vector<8x4xf32> to vector<1x1xf32>
    %745 = vector.broadcast %744 : vector<1x1xf32> to vector<16x16xf32>
    %746 = arith.mulf %606, %745 : vector<16x16xf32>
    %747 = arith.addf %743, %746 : vector<16x16xf32>
    %748 = vector.extract_strided_slice %2 {offsets = [6, 0], sizes = [1, 1], strides = [1, 1]} : vector<8x1xf32> to vector<1x1xf32>
    %749 = vector.broadcast %748 : vector<1x1xf32> to vector<16x16xf32>
    %750 = arith.addf %747, %749 : vector<16x16xf32>
    %c1_289 = arith.constant 1 : index
    %c6_290 = arith.constant 6 : index
    %c0_291 = arith.constant 0 : index
    %c0_292 = arith.constant 0 : index
    %751 = vector.load %arg5[%c1_289, %c6_290, %c0_291, %c0_292] : memref<2x8x16x16xf32, #tpu.memory_space<vmem>>, vector<1x1x16x16xf32>
    %752 = vector.shape_cast %751 : vector<1x1x16x16xf32> to vector<16x16xf32>
    %753 = vector.shape_cast %750 : vector<16x16xf32> to vector<1x1x16x16xf32>
    tpu.vector_store %arg5[%c1_289, %c6_290, %c0_291, %c0_292], %753 {strides = array<i32>} : memref<2x8x16x16xf32, #tpu.memory_space<vmem>>, vector<1x1x16x16xf32>,
    %754 = vector.extract_strided_slice %1 {offsets = [7, 0], sizes = [1, 1], strides = [1, 1]} : vector<8x4xf32> to vector<1x1xf32>
    %755 = vector.broadcast %754 : vector<1x1xf32> to vector<16x16xf32>
    %756 = arith.mulf %447, %755 : vector<16x16xf32>
    %757 = vector.extract_strided_slice %1 {offsets = [7, 1], sizes = [1, 1], strides = [1, 1]} : vector<8x4xf32> to vector<1x1xf32>
    %758 = vector.broadcast %757 : vector<1x1xf32> to vector<16x16xf32>
    %759 = arith.mulf %500, %758 : vector<16x16xf32>
    %760 = arith.addf %756, %759 : vector<16x16xf32>
    %761 = vector.extract_strided_slice %1 {offsets = [7, 2], sizes = [1, 1], strides = [1, 1]} : vector<8x4xf32> to vector<1x1xf32>
    %762 = vector.broadcast %761 : vector<1x1xf32> to vector<16x16xf32>
    %763 = arith.mulf %553, %762 : vector<16x16xf32>
    %764 = arith.addf %760, %763 : vector<16x16xf32>
    %765 = vector.extract_strided_slice %1 {offsets = [7, 3], sizes = [1, 1], strides = [1, 1]} : vector<8x4xf32> to vector<1x1xf32>
    %766 = vector.broadcast %765 : vector<1x1xf32> to vector<16x16xf32>
    %767 = arith.mulf %606, %766 : vector<16x16xf32>
    %768 = arith.addf %764, %767 : vector<16x16xf32>
    %769 = vector.extract_strided_slice %2 {offsets = [7, 0], sizes = [1, 1], strides = [1, 1]} : vector<8x1xf32> to vector<1x1xf32>
    %770 = vector.broadcast %769 : vector<1x1xf32> to vector<16x16xf32>
    %771 = arith.addf %768, %770 : vector<16x16xf32>
    %c1_293 = arith.constant 1 : index
    %c7_294 = arith.constant 7 : index
    %c0_295 = arith.constant 0 : index
    %c0_296 = arith.constant 0 : index
    %772 = vector.load %arg5[%c1_293, %c7_294, %c0_295, %c0_296] : memref<2x8x16x16xf32, #tpu.memory_space<vmem>>, vector<1x1x16x16xf32>
    %773 = vector.shape_cast %772 : vector<1x1x16x16xf32> to vector<16x16xf32>
    %774 = vector.shape_cast %771 : vector<16x16xf32> to vector<1x1x16x16xf32>
    tpu.vector_store %arg5[%c1_293, %c7_294, %c0_295, %c0_296], %774 {strides = array<i32>} : memref<2x8x16x16xf32, #tpu.memory_space<vmem>>, vector<1x1x16x16xf32>,
    return
  }
  func.func @transform_0(%arg0: i32) -> (i32, i32, i32, i32) {
    %c0_i32 = arith.constant 0 : i32
    %c0_i32_0 = arith.constant 0 : i32
    %c0_i32_1 = arith.constant 0 : i32
    %c0_i32_2 = arith.constant 0 : i32
    return %arg0, %c0_i32, %c0_i32_0, %c0_i32_1 : i32, i32, i32, i32
  }
  func.func @transform_1(%arg0: i32) -> (i32, i32) {
    %c0_i32 = arith.constant 0 : i32
    %c0_i32_0 = arith.constant 0 : i32
    %c0_i32_1 = arith.constant 0 : i32
    return %c0_i32, %c0_i32_0 : i32, i32
  }
  func.func @transform_2(%arg0: i32) -> (i32, i32) {
    %c0_i32 = arith.constant 0 : i32
    %c0_i32_0 = arith.constant 0 : i32
    %c0_i32_1 = arith.constant 0 : i32
    return %c0_i32, %c0_i32_0 : i32, i32
  }
  func.func @transform_3(%arg0: i32) -> (i32, i32) {
    %c0_i32 = arith.constant 0 : i32
    %c0_i32_0 = arith.constant 0 : i32
    %c0_i32_1 = arith.constant 0 : i32
    return %c0_i32, %c0_i32_0 : i32, i32
  }
  func.func @transform_4(%arg0: i32) -> (i32, i32, i32, i32) {
    %c0_i32 = arith.constant 0 : i32
    %c0_i32_0 = arith.constant 0 : i32
    %c0_i32_1 = arith.constant 0 : i32
    %c0_i32_2 = arith.constant 0 : i32
    return %arg0, %c0_i32, %c0_i32_0, %c0_i32_1 : i32, i32, i32, i32
  }
}

</mosaic_0001>

<llo_original>
// kernel: tpu_custom_call.1
$region0: #{tpu_custom_call.1}
  #allocation0 [shape = 'u32[]', space=smem, size = 0x4, offset = 0x4, fixed_abs, tag = 'smem constant byte address 0x4 - core index']
  #allocation1 [shape = 'u32[144,128]{1,0:T(1,128)}', space=vmem, size = 0x12000, scoped, tag = 'internal scratch']
  #allocation2 [shape = 'f32[4,18,18]{2,1,0:T(8,128)}', space=vmem, size = 0xc000, scoped, tag = 'scratch operand']
  %s0 = inlined_call_operand.hbm [shape: f32[2,4,16,16], index: 0, kind: input, shape index: {}]
  %s1 = inlined_call_operand.hbm [shape: f32[4,9], index: 1, kind: input, shape index: {}]
  %s2 = inlined_call_operand.hbm [shape: f32[8,4], index: 2, kind: input, shape index: {}]
  %s3 = inlined_call_operand.hbm [shape: f32[8,1], index: 3, kind: input, shape index: {}]
  %s4 = inlined_call_operand.hbm [shape: f32[2,8,16,16], index: 4, kind: output, shape index: {}]
  %s5 = sld [smem:[#allocation0]]
  $region42: #{tpu_custom_call.1} parent=0
    _
  %s7 = ssub.s32 1, %s5
  %s8 = scalar_select 0, %s7, %s5
  $region1: #{tpu_custom_call.1} parent=0
    #allocation3 [shape = 'u8[65536]{0}', space=vmem, size = 0x10000, scoped, tag = 'input window, operand 0, single buffered']
    #allocation4 [shape = 's32[1]{0}', space=sflag, size = 0x4, scoped, tag = 'scoped memory for tpu_custom_call.1']
    #allocation5 [shape = 's32[1]{0}', space=sflag, size = 0x4, scoped, tag = 'scoped memory for tpu_custom_call.1']
    #allocation6 [shape = 'u8[2048]{0}', space=vmem, size = 0x800, scoped, tag = 'input window, operand 1, single buffered']
    #allocation7 [shape = 's32[1]{0}', space=sflag, size = 0x4, scoped, tag = 'scoped memory for tpu_custom_call.1']
    #allocation8 [shape = 'u8[4096]{0}', space=vmem, size = 0x1000, scoped, tag = 'input window, operand 2, single buffered']
    #allocation9 [shape = 'u8[4096]{0}', space=vmem, size = 0x1000, scoped, tag = 'input window, operand 3, single buffered']
    #allocation10 [shape = 's32[1]{0}', space=sflag, size = 0x4, scoped, tag = 'scoped memory for tpu_custom_call.1']
    #allocation11 [shape = 'u8[131072]{0}', space=vmem, size = 0x20000, scoped, tag = 'output window, operand 0, single buffered']
    %9 = vsyncpa [#allocation4], 0
    %10 = vsyncpa [#allocation7], 0
    %11 = vsyncpa [#allocation10], 0
    %12 = vsyncpa [#allocation5], 0
    // Predicated region
    $region2: #{tpu_custom_call.1} parent=1 // pred_check
      _
    $region3: #{tpu_custom_call.1} parent=1 // pred_check_branch
      %14 = sbr.rel (0) target = $region5
    $region4: #{tpu_custom_call.1} parent=1 // pred_region
      %s16 = ssub.s32 2048, 2048
      %17 = vsyncadd [#allocation4], %s16
      %s18 = sshll.u32 [#allocation3], 4
      %s19 = int_to_ptr.vmem [resolvable:$true] %s18
      %24 = dma.hbm_to_vmem [thread:$0]  %s0, 2048, %s19, [#allocation4], 128, 128, 8
    $region5: #{tpu_custom_call.1} parent=1 // pred_fallthru
      _
    // Predicated region
    $region6: #{tpu_custom_call.1} parent=1 // pred_check
      _
    $region7: #{tpu_custom_call.1} parent=1 // pred_check_branch
      %26 = sbr.rel (0) target = $region9
    $region8: #{tpu_custom_call.1} parent=1 // pred_region
      %s28 = ssub.s32 64, 64
      %29 = vsyncadd [#allocation7], %s28
      %s31 = sshll.u32 [#allocation6], 4
      %s32 = int_to_ptr.vmem [resolvable:$true] %s31
      %34 = dma.hbm_to_vmem [thread:$0]  %s1, 64, %s32, [#allocation7]
    $region9: #{tpu_custom_call.1} parent=1 // pred_fallthru
      _
    // Predicated region
    $region10: #{tpu_custom_call.1} parent=1 // pred_check
      _
    $region11: #{tpu_custom_call.1} parent=1 // pred_check_branch
      %36 = sbr.rel (0) target = $region13
    $region12: #{tpu_custom_call.1} parent=1 // pred_region
      %s38 = ssub.s32 128, 128
      %39 = vsyncadd [#allocation7], %s38
      %s41 = sshll.u32 [#allocation8], 4
      %s42 = int_to_ptr.vmem [resolvable:$true] %s41
      %44 = dma.hbm_to_vmem [thread:$0]  %s2, 128, %s42, [#allocation7]
    $region13: #{tpu_custom_call.1} parent=1 // pred_fallthru
      _
    // Predicated region
    $region14: #{tpu_custom_call.1} parent=1 // pred_check
      _
    $region15: #{tpu_custom_call.1} parent=1 // pred_check_branch
      %46 = sbr.rel (0) target = $region17
    $region16: #{tpu_custom_call.1} parent=1 // pred_region
      %s48 = ssub.s32 128, 128
      %49 = vsyncadd [#allocation10], %s48
      %s51 = sshll.u32 [#allocation9], 4
      %s52 = int_to_ptr.vmem [resolvable:$true] %s51
      %54 = dma.hbm_to_vmem [thread:$0]  %s3, 128, %s52, [#allocation10]
    $region17: #{tpu_custom_call.1} parent=1 // pred_fallthru
      _
    // Predicated region
    $region18: #{tpu_custom_call.1} parent=1 // pred_check
      _
    $region19: #{tpu_custom_call.1} parent=1 // pred_check_branch
      %56 = sbr.rel (0) target = $region21
    $region20: #{tpu_custom_call.1} parent=1 // pred_region
      %57 = dma.done [#allocation4], 2048
    $region21: #{tpu_custom_call.1} parent=1 // pred_fallthru
      _
    // Predicated region
    $region22: #{tpu_custom_call.1} parent=1 // pred_check
      _
    $region23: #{tpu_custom_call.1} parent=1 // pred_check_branch
      %59 = sbr.rel (0) target = $region25
    $region24: #{tpu_custom_call.1} parent=1 // pred_region
      %60 = dma.done [#allocation7], 64
    $region25: #{tpu_custom_call.1} parent=1 // pred_fallthru
      _
    // Predicated region
    $region26: #{tpu_custom_call.1} parent=1 // pred_check
      _
    $region27: #{tpu_custom_call.1} parent=1 // pred_check_branch
      %62 = sbr.rel (0) target = $region29
    $region28: #{tpu_custom_call.1} parent=1 // pred_region
      %63 = dma.done [#allocation7], 128
    $region29: #{tpu_custom_call.1} parent=1 // pred_fallthru
      _
    // Predicated region
    $region30: #{tpu_custom_call.1} parent=1 // pred_check
      _
    $region31: #{tpu_custom_call.1} parent=1 // pred_check_branch
      %65 = sbr.rel (0) target = $region33
    $region32: #{tpu_custom_call.1} parent=1 // pred_region
      %66 = dma.done [#allocation10], 128
    $region33: #{tpu_custom_call.1} parent=1 // pred_fallthru
      _
    %v67 = vld [vmem:[#allocation6] sm:$0xf]
    %v68 = vld [vmem:[#allocation8] sm:$0xff]
    %v69 = vld [vmem:[#allocation9] sm:$0xff]
    %vm70 = vcmask 146432
    %71 = vst.msk [vmem:[#allocation2] sm:$0xff] %vm70, 0.0
    %72 = vst.msk [vmem:[#allocation2 + $0x8] sm:$0xff] %vm70, 0.0
    %vm73 = vcmask 140288
    %74 = vst.msk [vmem:[#allocation2 + $0x10] sm:$0x3] %vm73, 0.0
    %75 = vst.msk [vmem:[#allocation2 + $0x18] sm:$0xff] %vm70, 0.0
    %76 = vst.msk [vmem:[#allocation2 + $0x20] sm:$0xff] %vm70, 0.0
    %77 = vst.msk [vmem:[#allocation2 + $0x28] sm:$0x3] %vm73, 0.0
    %78 = vst.msk [vmem:[#allocation2 + $0x30] sm:$0xff] %vm70, 0.0
    %79 = vst.msk [vmem:[#allocation2 + $0x38] sm:$0xff] %vm70, 0.0
    %80 = vst.msk [vmem:[#allocation2 + $0x40] sm:$0x3] %vm73, 0.0
    %81 = vst.msk [vmem:[#allocation2 + $0x48] sm:$0xff] %vm70, 0.0
    %82 = vst.msk [vmem:[#allocation2 + $0x50] sm:$0xff] %vm70, 0.0
    %83 = vst.msk [vmem:[#allocation2 + $0x58] sm:$0x3] %vm73, 0.0
    %v84 = vld [vmem:[#allocation3] sm:$0xff]
    %v85 = vld [vmem:[#allocation3 + $0x8] sm:$0xff]
    %v86 = vld [vmem:[#allocation3 + $0x10] sm:$0xff]
    %v87 = vld [vmem:[#allocation3 + $0x18] sm:$0xff]
    %v88 = vld [vmem:[#allocation3 + $0x20] sm:$0xff]
    %v89 = vld [vmem:[#allocation3 + $0x28] sm:$0xff]
    %v90 = vld [vmem:[#allocation3 + $0x30] sm:$0xff]
    %v91 = vld [vmem:[#allocation3 + $0x38] sm:$0xff]
    %100 = vrot.lane.b32.xlu0 %v84, 1
    %v101 = vpop.permute.xlu0 %100
    %102 = vrot.lane.b32.xlu0 %v85, 1
    %v103 = vpop.permute.xlu0 %102
    %104 = vrot.lane.b32.xlu0 %v86, 1
    %v105 = vpop.permute.xlu0 %104
    %106 = vrot.lane.b32.xlu0 %v87, 1
    %v107 = vpop.permute.xlu0 %106
    %108 = vrot.lane.b32.xlu0 %v88, 1
    %v109 = vpop.permute.xlu0 %108
    %110 = vrot.lane.b32.xlu0 %v89, 1
    %v111 = vpop.permute.xlu0 %110
    %112 = vrot.lane.b32.xlu0 %v90, 1
    %v113 = vpop.permute.xlu0 %112
    %114 = vrot.lane.b32.xlu0 %v91, 1
    %v115 = vpop.permute.xlu0 %114
    %vm124 = vcmask 7168
    %v125 = vsel %vm124, 0.0, %v101
    %v126 = vsel %vm124, 0.0, %v103
    %v127 = vsel %vm124, 0.0, %v105
    %v128 = vsel %vm124, 0.0, %v107
    %v129 = vsel %vm124, 0.0, %v109
    %v130 = vsel %vm124, 0.0, %v111
    %v131 = vsel %vm124, 0.0, %v113
    %v132 = vsel %vm124, 0.0, %v115
    %vm133 = vcmask 138240
    %v134 = vsel %vm133, %v125, 0.0
    %v135 = vsel %vm133, %v126, 0.0
    %v136 = vsel %vm133, %v127, 0.0
    %v137 = vsel %vm133, %v128, 0.0
    %v138 = vsel %vm133, %v129, 0.0
    %v139 = vsel %vm133, %v130, 0.0
    %v140 = vsel %vm133, %v131, 0.0
    %v141 = vsel %vm133, %v132, 0.0
    %142 = vst.msk [vmem:[#allocation2 + $0x1] sm:$0xff] %vm70, %v134
    %143 = vst.msk [vmem:[#allocation2 + $0x9] sm:$0xff] %vm70, %v135
    %144 = vst.msk [vmem:[#allocation2 + $0x19] sm:$0xff] %vm70, %v136
    %145 = vst.msk [vmem:[#allocation2 + $0x21] sm:$0xff] %vm70, %v137
    %146 = vst.msk [vmem:[#allocation2 + $0x31] sm:$0xff] %vm70, %v138
    %147 = vst.msk [vmem:[#allocation2 + $0x39] sm:$0xff] %vm70, %v139
    %148 = vst.msk [vmem:[#allocation2 + $0x49] sm:$0xff] %vm70, %v140
    %149 = vst.msk [vmem:[#allocation2 + $0x51] sm:$0xff] %vm70, %v141
    %v150 = vld [vmem:[#allocation2] sm:$0xff]
    %v151 = vld [vmem:[#allocation2 + $0x8] sm:$0xff]
    %s153 = vtos %v67
    %v154 = vstv %s153
    %v156 = vmul.f32 %v150, %v154
    %v157 = vmul.f32 %v151, %v154
    %158 = vrot.lane.b32.xlu0 %v67, 127
    %v159 = vpop.permute.xlu0 %158
    %s160 = vtos %v159
    %v161 = vstv %s160
    %v163 = vmul.f32 %v150, %v161
    %v164 = vmul.f32 %v151, %v161
    %167 = vrot.lane.b32.xlu0 %v163, 127
    %v168 = vpop.permute.xlu0 %167
    %169 = vrot.lane.b32.xlu0 %v164, 127
    %v170 = vpop.permute.xlu0 %169
    %v173 = vadd.f32 %v156, %v168
    %v174 = vadd.f32 %v157, %v170
    %175 = vrot.lane.b32.xlu0 %v67, 126
    %v176 = vpop.permute.xlu0 %175
    %s177 = vtos %v176
    %v178 = vstv %s177
    %v180 = vmul.f32 %v150, %v178
    %v181 = vmul.f32 %v151, %v178
    %184 = vrot.lane.b32.xlu0 %v180, 126
    %v185 = vpop.permute.xlu0 %184
    %186 = vrot.lane.b32.xlu0 %v181, 126
    %v187 = vpop.permute.xlu0 %186
    %v190 = vadd.f32 %v173, %v185
    %v191 = vadd.f32 %v174, %v187
    %v192 = vld [vmem:[#allocation2 + $0x1] sm:$0xff]
    %v193 = vld [vmem:[#allocation2 + $0x9] sm:$0xff]
    %194 = vrot.lane.b32.xlu0 %v67, 125
    %v195 = vpop.permute.xlu0 %194
    %s196 = vtos %v195
    %v197 = vstv %s196
    %v199 = vmul.f32 %v192, %v197
    %v200 = vmul.f32 %v193, %v197
    %v201 = vadd.f32 %v190, %v199
    %v202 = vadd.f32 %v191, %v200
    %203 = vrot.lane.b32.xlu0 %v67, 124
    %v204 = vpop.permute.xlu0 %203
    %s205 = vtos %v204
    %v206 = vstv %s205
    %v208 = vmul.f32 %v192, %v206
    %v209 = vmul.f32 %v193, %v206
    %212 = vrot.lane.b32.xlu0 %v208, 127
    %v213 = vpop.permute.xlu0 %212
    %214 = vrot.lane.b32.xlu0 %v209, 127
    %v215 = vpop.permute.xlu0 %214
    %v218 = vadd.f32 %v201, %v213
    %v219 = vadd.f32 %v202, %v215
    %220 = vrot.lane.b32.xlu0 %v67, 123
    %v221 = vpop.permute.xlu0 %220
    %s222 = vtos %v221
    %v223 = vstv %s222
    %v225 = vmul.f32 %v192, %v223
    %v226 = vmul.f32 %v193, %v223
    %229 = vrot.lane.b32.xlu0 %v225, 126
    %v230 = vpop.permute.xlu0 %229
    %231 = vrot.lane.b32.xlu0 %v226, 126
    %v232 = vpop.permute.xlu0 %231
    %v235 = vadd.f32 %v218, %v230
    %v236 = vadd.f32 %v219, %v232
    %v237 = vld [vmem:[#allocation2 + $0x2] sm:$0xff]
    %v238 = vld [vmem:[#allocation2 + $0xa] sm:$0xff]
    %239 = vrot.lane.b32.xlu0 %v67, 122
    %v240 = vpop.permute.xlu0 %239
    %s241 = vtos %v240
    %v242 = vstv %s241
    %v244 = vmul.f32 %v237, %v242
    %v245 = vmul.f32 %v238, %v242
    %v246 = vadd.f32 %v235, %v244
    %v247 = vadd.f32 %v236, %v245
    %248 = vrot.lane.b32.xlu0 %v67, 121
    %v249 = vpop.permute.xlu0 %248
    %s250 = vtos %v249
    %v251 = vstv %s250
    %v253 = vmul.f32 %v237, %v251
    %v254 = vmul.f32 %v238, %v251
    %257 = vrot.lane.b32.xlu0 %v253, 127
    %v258 = vpop.permute.xlu0 %257
    %259 = vrot.lane.b32.xlu0 %v254, 127
    %v260 = vpop.permute.xlu0 %259
    %v263 = vadd.f32 %v246, %v258
    %v264 = vadd.f32 %v247, %v260
    %265 = vrot.lane.b32.xlu0 %v67, 120
    %v266 = vpop.permute.xlu0 %265
    %s267 = vtos %v266
    %v268 = vstv %s267
    %v270 = vmul.f32 %v237, %v268
    %v271 = vmul.f32 %v238, %v268
    %274 = vrot.lane.b32.xlu0 %v270, 126
    %v275 = vpop.permute.xlu0 %274
    %276 = vrot.lane.b32.xlu0 %v271, 126
    %v277 = vpop.permute.xlu0 %276
    %v280 = vadd.f32 %v263, %v275
    %v281 = vadd.f32 %v264, %v277
    %s282 = scalar_lea.vmem [#allocation2], 24
    %v283 = vld [vmem:[%s282] sm:$0xff]
    %v284 = vld [vmem:[%s282 + $0x8] sm:$0xff]
    %v285 = vrot.slane %v67, 1
    %s286 = vtos %v285
    %v287 = vstv %s286
    %v289 = vmul.f32 %v283, %v287
    %v290 = vmul.f32 %v284, %v287
    %291 = vrot.lane.b32.xlu0 %v285, 127
    %v292 = vpop.permute.xlu0 %291
    %s293 = vtos %v292
    %v294 = vstv %s293
    %v296 = vmul.f32 %v283, %v294
    %v297 = vmul.f32 %v284, %v294
    %300 = vrot.lane.b32.xlu0 %v296, 127
    %v301 = vpop.permute.xlu0 %300
    %302 = vrot.lane.b32.xlu0 %v297, 127
    %v303 = vpop.permute.xlu0 %302
    %v306 = vadd.f32 %v289, %v301
    %v307 = vadd.f32 %v290, %v303
    %308 = vrot.lane.b32.xlu0 %v285, 126
    %v309 = vpop.permute.xlu0 %308
    %s310 = vtos %v309
    %v311 = vstv %s310
    %v313 = vmul.f32 %v283, %v311
    %v314 = vmul.f32 %v284, %v311
    %317 = vrot.lane.b32.xlu0 %v313, 126
    %v318 = vpop.permute.xlu0 %317
    %319 = vrot.lane.b32.xlu0 %v314, 126
    %v320 = vpop.permute.xlu0 %319
    %v323 = vadd.f32 %v306, %v318
    %v324 = vadd.f32 %v307, %v320
    %v325 = vld [vmem:[%s282 + $0x1] sm:$0xff]
    %v326 = vld [vmem:[%s282 + $0x9] sm:$0xff]
    %327 = vrot.lane.b32.xlu0 %v285, 125
    %v328 = vpop.permute.xlu0 %327
    %s329 = vtos %v328
    %v330 = vstv %s329
    %v332 = vmul.f32 %v325, %v330
    %v333 = vmul.f32 %v326, %v330
    %v334 = vadd.f32 %v323, %v332
    %v335 = vadd.f32 %v324, %v333
    %336 = vrot.lane.b32.xlu0 %v285, 124
    %v337 = vpop.permute.xlu0 %336
    %s338 = vtos %v337
    %v339 = vstv %s338
    %v341 = vmul.f32 %v325, %v339
    %v342 = vmul.f32 %v326, %v339
    %345 = vrot.lane.b32.xlu0 %v341, 127
    %v346 = vpop.permute.xlu0 %345
    %347 = vrot.lane.b32.xlu0 %v342, 127
    %v348 = vpop.permute.xlu0 %347
    %v351 = vadd.f32 %v334, %v346
    %v352 = vadd.f32 %v335, %v348
    %353 = vrot.lane.b32.xlu0 %v285, 123
    %v354 = vpop.permute.xlu0 %353
    %s355 = vtos %v354
    %v356 = vstv %s355
    %v358 = vmul.f32 %v325, %v356
    %v359 = vmul.f32 %v326, %v356
    %362 = vrot.lane.b32.xlu0 %v358, 126
    %v363 = vpop.permute.xlu0 %362
    %364 = vrot.lane.b32.xlu0 %v359, 126
    %v365 = vpop.permute.xlu0 %364
    %v368 = vadd.f32 %v351, %v363
    %v369 = vadd.f32 %v352, %v365
    %v370 = vld [vmem:[%s282 + $0x2] sm:$0xff]
    %v371 = vld [vmem:[%s282 + $0xa] sm:$0xff]
    %372 = vrot.lane.b32.xlu0 %v285, 122
    %v373 = vpop.permute.xlu0 %372
    %s374 = vtos %v373
    %v375 = vstv %s374
    %v377 = vmul.f32 %v370, %v375
    %v378 = vmul.f32 %v371, %v375
    %v379 = vadd.f32 %v368, %v377
    %v380 = vadd.f32 %v369, %v378
    %381 = vrot.lane.b32.xlu0 %v285, 121
    %v382 = vpop.permute.xlu0 %381
    %s383 = vtos %v382
    %v384 = vstv %s383
    %v386 = vmul.f32 %v370, %v384
    %v387 = vmul.f32 %v371, %v384
    %390 = vrot.lane.b32.xlu0 %v386, 127
    %v391 = vpop.permute.xlu0 %390
    %392 = vrot.lane.b32.xlu0 %v387, 127
    %v393 = vpop.permute.xlu0 %392
    %v396 = vadd.f32 %v379, %v391
    %v397 = vadd.f32 %v380, %v393
    %398 = vrot.lane.b32.xlu0 %v285, 120
    %v399 = vpop.permute.xlu0 %398
    %s400 = vtos %v399
    %v401 = vstv %s400
    %v403 = vmul.f32 %v370, %v401
    %v404 = vmul.f32 %v371, %v401
    %407 = vrot.lane.b32.xlu0 %v403, 126
    %v408 = vpop.permute.xlu0 %407
    %409 = vrot.lane.b32.xlu0 %v404, 126
    %v410 = vpop.permute.xlu0 %409
    %v413 = vadd.f32 %v396, %v408
    %v414 = vadd.f32 %v397, %v410
    %s415 = scalar_lea.vmem [#allocation2], 48
    %v416 = vld [vmem:[%s415] sm:$0xff]
    %v417 = vld [vmem:[%s415 + $0x8] sm:$0xff]
    %v418 = vrot.slane %v67, 2
    %s419 = vtos %v418
    %v420 = vstv %s419
    %v422 = vmul.f32 %v416, %v420
    %v423 = vmul.f32 %v417, %v420
    %424 = vrot.lane.b32.xlu0 %v418, 127
    %v425 = vpop.permute.xlu0 %424
    %s426 = vtos %v425
    %v427 = vstv %s426
    %v429 = vmul.f32 %v416, %v427
    %v430 = vmul.f32 %v417, %v427
    %433 = vrot.lane.b32.xlu0 %v429, 127
    %v434 = vpop.permute.xlu0 %433
    %435 = vrot.lane.b32.xlu0 %v430, 127
    %v436 = vpop.permute.xlu0 %435
    %v439 = vadd.f32 %v422, %v434
    %v440 = vadd.f32 %v423, %v436
    %441 = vrot.lane.b32.xlu0 %v418, 126
    %v442 = vpop.permute.xlu0 %441
    %s443 = vtos %v442
    %v444 = vstv %s443
    %v446 = vmul.f32 %v416, %v444
    %v447 = vmul.f32 %v417, %v444
    %450 = vrot.lane.b32.xlu0 %v446, 126
    %v451 = vpop.permute.xlu0 %450
    %452 = vrot.lane.b32.xlu0 %v447, 126
    %v453 = vpop.permute.xlu0 %452
    %v456 = vadd.f32 %v439, %v451
    %v457 = vadd.f32 %v440, %v453
    %v458 = vld [vmem:[%s415 + $0x1] sm:$0xff]
    %v459 = vld [vmem:[%s415 + $0x9] sm:$0xff]
    %460 = vrot.lane.b32.xlu0 %v418, 125
    %v461 = vpop.permute.xlu0 %460
    %s462 = vtos %v461
    %v463 = vstv %s462
    %v465 = vmul.f32 %v458, %v463
    %v466 = vmul.f32 %v459, %v463
    %v467 = vadd.f32 %v456, %v465
    %v468 = vadd.f32 %v457, %v466
    %469 = vrot.lane.b32.xlu0 %v418, 124
    %v470 = vpop.permute.xlu0 %469
    %s471 = vtos %v470
    %v472 = vstv %s471
    %v474 = vmul.f32 %v458, %v472
    %v475 = vmul.f32 %v459, %v472
    %478 = vrot.lane.b32.xlu0 %v474, 127
    %v479 = vpop.permute.xlu0 %478
    %480 = vrot.lane.b32.xlu0 %v475, 127
    %v481 = vpop.permute.xlu0 %480
    %v484 = vadd.f32 %v467, %v479
    %v485 = vadd.f32 %v468, %v481
    %486 = vrot.lane.b32.xlu0 %v418, 123
    %v487 = vpop.permute.xlu0 %486
    %s488 = vtos %v487
    %v489 = vstv %s488
    %v491 = vmul.f32 %v458, %v489
    %v492 = vmul.f32 %v459, %v489
    %495 = vrot.lane.b32.xlu0 %v491, 126
    %v496 = vpop.permute.xlu0 %495
    %497 = vrot.lane.b32.xlu0 %v492, 126
    %v498 = vpop.permute.xlu0 %497
    %v501 = vadd.f32 %v484, %v496
    %v502 = vadd.f32 %v485, %v498
    %v503 = vld [vmem:[%s415 + $0x2] sm:$0xff]
    %v504 = vld [vmem:[%s415 + $0xa] sm:$0xff]
    %505 = vrot.lane.b32.xlu0 %v418, 122
    %v506 = vpop.permute.xlu0 %505
    %s507 = vtos %v506
    %v508 = vstv %s507
    %v510 = vmul.f32 %v503, %v508
    %v511 = vmul.f32 %v504, %v508
    %v512 = vadd.f32 %v501, %v510
    %v513 = vadd.f32 %v502, %v511
    %514 = vrot.lane.b32.xlu0 %v418, 121
    %v515 = vpop.permute.xlu0 %514
    %s516 = vtos %v515
    %v517 = vstv %s516
    %v519 = vmul.f32 %v503, %v517
    %v520 = vmul.f32 %v504, %v517
    %523 = vrot.lane.b32.xlu0 %v519, 127
    %v524 = vpop.permute.xlu0 %523
    %525 = vrot.lane.b32.xlu0 %v520, 127
    %v526 = vpop.permute.xlu0 %525
    %v529 = vadd.f32 %v512, %v524
    %v530 = vadd.f32 %v513, %v526
    %531 = vrot.lane.b32.xlu0 %v418, 120
    %v532 = vpop.permute.xlu0 %531
    %s533 = vtos %v532
    %v534 = vstv %s533
    %v536 = vmul.f32 %v503, %v534
    %v537 = vmul.f32 %v504, %v534
    %540 = vrot.lane.b32.xlu0 %v536, 126
    %v541 = vpop.permute.xlu0 %540
    %542 = vrot.lane.b32.xlu0 %v537, 126
    %v543 = vpop.permute.xlu0 %542
    %v546 = vadd.f32 %v529, %v541
    %v547 = vadd.f32 %v530, %v543
    %s548 = scalar_lea.vmem [#allocation2], 72
    %v549 = vld [vmem:[%s548] sm:$0xff]
    %v550 = vld [vmem:[%s548 + $0x8] sm:$0xff]
    %v551 = vrot.slane %v67, 3
    %s552 = vtos %v551
    %v553 = vstv %s552
    %v555 = vmul.f32 %v549, %v553
    %v556 = vmul.f32 %v550, %v553
    %557 = vrot.lane.b32.xlu0 %v551, 127
    %v558 = vpop.permute.xlu0 %557
    %s559 = vtos %v558
    %v560 = vstv %s559
    %v562 = vmul.f32 %v549, %v560
    %v563 = vmul.f32 %v550, %v560
    %566 = vrot.lane.b32.xlu0 %v562, 127
    %v567 = vpop.permute.xlu0 %566
    %568 = vrot.lane.b32.xlu0 %v563, 127
    %v569 = vpop.permute.xlu0 %568
    %v572 = vadd.f32 %v555, %v567
    %v573 = vadd.f32 %v556, %v569
    %574 = vrot.lane.b32.xlu0 %v551, 126
    %v575 = vpop.permute.xlu0 %574
    %s576 = vtos %v575
    %v577 = vstv %s576
    %v579 = vmul.f32 %v549, %v577
    %v580 = vmul.f32 %v550, %v577
    %583 = vrot.lane.b32.xlu0 %v579, 126
    %v584 = vpop.permute.xlu0 %583
    %585 = vrot.lane.b32.xlu0 %v580, 126
    %v586 = vpop.permute.xlu0 %585
    %v589 = vadd.f32 %v572, %v584
    %v590 = vadd.f32 %v573, %v586
    %v591 = vld [vmem:[%s548 + $0x1] sm:$0xff]
    %v592 = vld [vmem:[%s548 + $0x9] sm:$0xff]
    %593 = vrot.lane.b32.xlu0 %v551, 125
    %v594 = vpop.permute.xlu0 %593
    %s595 = vtos %v594
    %v596 = vstv %s595
    %v598 = vmul.f32 %v591, %v596
    %v599 = vmul.f32 %v592, %v596
    %v600 = vadd.f32 %v589, %v598
    %v601 = vadd.f32 %v590, %v599
    %602 = vrot.lane.b32.xlu0 %v551, 124
    %v603 = vpop.permute.xlu0 %602
    %s604 = vtos %v603
    %v605 = vstv %s604
    %v607 = vmul.f32 %v591, %v605
    %v608 = vmul.f32 %v592, %v605
    %611 = vrot.lane.b32.xlu0 %v607, 127
    %v612 = vpop.permute.xlu0 %611
    %613 = vrot.lane.b32.xlu0 %v608, 127
    %v614 = vpop.permute.xlu0 %613
    %v617 = vadd.f32 %v600, %v612
    %v618 = vadd.f32 %v601, %v614
    %619 = vrot.lane.b32.xlu0 %v551, 123
    %v620 = vpop.permute.xlu0 %619
    %s621 = vtos %v620
    %v622 = vstv %s621
    %v624 = vmul.f32 %v591, %v622
    %v625 = vmul.f32 %v592, %v622
    %628 = vrot.lane.b32.xlu0 %v624, 126
    %v629 = vpop.permute.xlu0 %628
    %630 = vrot.lane.b32.xlu0 %v625, 126
    %v631 = vpop.permute.xlu0 %630
    %v634 = vadd.f32 %v617, %v629
    %v635 = vadd.f32 %v618, %v631
    %v636 = vld [vmem:[%s548 + $0x2] sm:$0xff]
    %v637 = vld [vmem:[%s548 + $0xa] sm:$0xff]
    %638 = vrot.lane.b32.xlu0 %v551, 122
    %v639 = vpop.permute.xlu0 %638
    %s640 = vtos %v639
    %v641 = vstv %s640
    %v643 = vmul.f32 %v636, %v641
    %v644 = vmul.f32 %v637, %v641
    %v645 = vadd.f32 %v634, %v643
    %v646 = vadd.f32 %v635, %v644
    %647 = vrot.lane.b32.xlu0 %v551, 121
    %v648 = vpop.permute.xlu0 %647
    %s649 = vtos %v648
    %v650 = vstv %s649
    %v652 = vmul.f32 %v636, %v650
    %v653 = vmul.f32 %v637, %v650
    %656 = vrot.lane.b32.xlu0 %v652, 127
    %v657 = vpop.permute.xlu0 %656
    %658 = vrot.lane.b32.xlu0 %v653, 127
    %v659 = vpop.permute.xlu0 %658
    %v662 = vadd.f32 %v645, %v657
    %v663 = vadd.f32 %v646, %v659
    %664 = vrot.lane.b32.xlu0 %v551, 120
    %v665 = vpop.permute.xlu0 %664
    %s666 = vtos %v665
    %v667 = vstv %s666
    %v669 = vmul.f32 %v636, %v667
    %v670 = vmul.f32 %v637, %v667
    %673 = vrot.lane.b32.xlu0 %v669, 126
    %v674 = vpop.permute.xlu0 %673
    %675 = vrot.lane.b32.xlu0 %v670, 126
    %v676 = vpop.permute.xlu0 %675
    %v679 = vadd.f32 %v662, %v674
    %v680 = vadd.f32 %v663, %v676
    %s682 = vtos %v68
    %v683 = vstv %s682
    %v685 = vmul.f32 %v280, %v683
    %v686 = vmul.f32 %v281, %v683
    %687 = vrot.lane.b32.xlu0 %v68, 127
    %v688 = vpop.permute.xlu0 %687
    %s689 = vtos %v688
    %v690 = vstv %s689
    %v692 = vmul.f32 %v413, %v690
    %v693 = vmul.f32 %v414, %v690
    %v694 = vadd.f32 %v685, %v692
    %v695 = vadd.f32 %v686, %v693
    %696 = vrot.lane.b32.xlu0 %v68, 126
    %v697 = vpop.permute.xlu0 %696
    %s698 = vtos %v697
    %v699 = vstv %s698
    %v701 = vmul.f32 %v546, %v699
    %v702 = vmul.f32 %v547, %v699
    %v703 = vadd.f32 %v694, %v701
    %v704 = vadd.f32 %v695, %v702
    %705 = vrot.lane.b32.xlu0 %v68, 125
    %v706 = vpop.permute.xlu0 %705
    %s707 = vtos %v706
    %v708 = vstv %s707
    %v710 = vmul.f32 %v679, %v708
    %v711 = vmul.f32 %v680, %v708
    %v712 = vadd.f32 %v703, %v710
    %v713 = vadd.f32 %v704, %v711
    %s715 = vtos %v69
    %v716 = vstv %s715
    %v718 = vadd.f32 %v712, %v716
    %v719 = vadd.f32 %v713, %v716
    %vm720 = vcmask 130048
    %721 = vst.msk [vmem:[#allocation11] sm:$0xff] %vm720, %v718
    %722 = vst.msk [vmem:[#allocation11 + $0x8] sm:$0xff] %vm720, %v719
    %v723 = vrot.slane %v68, 1
    %s724 = vtos %v723
    %v725 = vstv %s724
    %v727 = vmul.f32 %v280, %v725
    %v728 = vmul.f32 %v281, %v725
    %729 = vrot.lane.b32.xlu0 %v723, 127
    %v730 = vpop.permute.xlu0 %729
    %s731 = vtos %v730
    %v732 = vstv %s731
    %v734 = vmul.f32 %v413, %v732
    %v735 = vmul.f32 %v414, %v732
    %v736 = vadd.f32 %v727, %v734
    %v737 = vadd.f32 %v728, %v735
    %738 = vrot.lane.b32.xlu0 %v723, 126
    %v739 = vpop.permute.xlu0 %738
    %s740 = vtos %v739
    %v741 = vstv %s740
    %v743 = vmul.f32 %v546, %v741
    %v744 = vmul.f32 %v547, %v741
    %v745 = vadd.f32 %v736, %v743
    %v746 = vadd.f32 %v737, %v744
    %747 = vrot.lane.b32.xlu0 %v723, 125
    %v748 = vpop.permute.xlu0 %747
    %s749 = vtos %v748
    %v750 = vstv %s749
    %v752 = vmul.f32 %v679, %v750
    %v753 = vmul.f32 %v680, %v750
    %v754 = vadd.f32 %v745, %v752
    %v755 = vadd.f32 %v746, %v753
    %v756 = vrot.slane %v69, 1
    %s757 = vtos %v756
    %v758 = vstv %s757
    %v760 = vadd.f32 %v754, %v758
    %v761 = vadd.f32 %v755, %v758
    %s762 = scalar_lea.vmem [#allocation11], 16
    %763 = vst.msk [vmem:[%s762] sm:$0xff] %vm720, %v760
    %764 = vst.msk [vmem:[%s762 + $0x8] sm:$0xff] %vm720, %v761
    %v765 = vrot.slane %v68, 2
    %s766 = vtos %v765
    %v767 = vstv %s766
    %v769 = vmul.f32 %v280, %v767
    %v770 = vmul.f32 %v281, %v767
    %771 = vrot.lane.b32.xlu0 %v765, 127
    %v772 = vpop.permute.xlu0 %771
    %s773 = vtos %v772
    %v774 = vstv %s773
    %v776 = vmul.f32 %v413, %v774
    %v777 = vmul.f32 %v414, %v774
    %v778 = vadd.f32 %v769, %v776
    %v779 = vadd.f32 %v770, %v777
    %780 = vrot.lane.b32.xlu0 %v765, 126
    %v781 = vpop.permute.xlu0 %780
    %s782 = vtos %v781
    %v783 = vstv %s782
    %v785 = vmul.f32 %v546, %v783
    %v786 = vmul.f32 %v547, %v783
    %v787 = vadd.f32 %v778, %v785
    %v788 = vadd.f32 %v779, %v786
    %789 = vrot.lane.b32.xlu0 %v765, 125
    %v790 = vpop.permute.xlu0 %789
    %s791 = vtos %v790
    %v792 = vstv %s791
    %v794 = vmul.f32 %v679, %v792
    %v795 = vmul.f32 %v680, %v792
    %v796 = vadd.f32 %v787, %v794
    %v797 = vadd.f32 %v788, %v795
    %v798 = vrot.slane %v69, 2
    %s799 = vtos %v798
    %v800 = vstv %s799
    %v802 = vadd.f32 %v796, %v800
    %v803 = vadd.f32 %v797, %v800
    %s804 = scalar_lea.vmem [#allocation11], 32
    %805 = vst.msk [vmem:[%s804] sm:$0xff] %vm720, %v802
    %806 = vst.msk [vmem:[%s804 + $0x8] sm:$0xff] %vm720, %v803
    %v807 = vrot.slane %v68, 3
    %s808 = vtos %v807
    %v809 = vstv %s808
    %v811 = vmul.f32 %v280, %v809
    %v812 = vmul.f32 %v281, %v809
    %813 = vrot.lane.b32.xlu0 %v807, 127
    %v814 = vpop.permute.xlu0 %813
    %s815 = vtos %v814
    %v816 = vstv %s815
    %v818 = vmul.f32 %v413, %v816
    %v819 = vmul.f32 %v414, %v816
    %v820 = vadd.f32 %v811, %v818
    %v821 = vadd.f32 %v812, %v819
    %822 = vrot.lane.b32.xlu0 %v807, 126
    %v823 = vpop.permute.xlu0 %822
    %s824 = vtos %v823
    %v825 = vstv %s824
    %v827 = vmul.f32 %v546, %v825
    %v828 = vmul.f32 %v547, %v825
    %v829 = vadd.f32 %v820, %v827
    %v830 = vadd.f32 %v821, %v828
    %831 = vrot.lane.b32.xlu0 %v807, 125
    %v832 = vpop.permute.xlu0 %831
    %s833 = vtos %v832
    %v834 = vstv %s833
    %v836 = vmul.f32 %v679, %v834
    %v837 = vmul.f32 %v680, %v834
    %v838 = vadd.f32 %v829, %v836
    %v839 = vadd.f32 %v830, %v837
    %v840 = vrot.slane %v69, 3
    %s841 = vtos %v840
    %v842 = vstv %s841
    %v844 = vadd.f32 %v838, %v842
    %v845 = vadd.f32 %v839, %v842
    %s846 = scalar_lea.vmem [#allocation11], 48
    %847 = vst.msk [vmem:[%s846] sm:$0xff] %vm720, %v844
    %848 = vst.msk [vmem:[%s846 + $0x8] sm:$0xff] %vm720, %v845
    %v849 = vrot.slane %v68, 4
    %s850 = vtos %v849
    %v851 = vstv %s850
    %v853 = vmul.f32 %v280, %v851
    %v854 = vmul.f32 %v281, %v851
    %855 = vrot.lane.b32.xlu0 %v849, 127
    %v856 = vpop.permute.xlu0 %855
    %s857 = vtos %v856
    %v858 = vstv %s857
    %v860 = vmul.f32 %v413, %v858
    %v861 = vmul.f32 %v414, %v858
    %v862 = vadd.f32 %v853, %v860
    %v863 = vadd.f32 %v854, %v861
    %864 = vrot.lane.b32.xlu0 %v849, 126
    %v865 = vpop.permute.xlu0 %864
    %s866 = vtos %v865
    %v867 = vstv %s866
    %v869 = vmul.f32 %v546, %v867
    %v870 = vmul.f32 %v547, %v867
    %v871 = vadd.f32 %v862, %v869
    %v872 = vadd.f32 %v863, %v870
    %873 = vrot.lane.b32.xlu0 %v849, 125
    %v874 = vpop.permute.xlu0 %873
    %s875 = vtos %v874
    %v876 = vstv %s875
    %v878 = vmul.f32 %v679, %v876
    %v879 = vmul.f32 %v680, %v876
    %v880 = vadd.f32 %v871, %v878
    %v881 = vadd.f32 %v872, %v879
    %v882 = vrot.slane %v69, 4
    %s883 = vtos %v882
    %v884 = vstv %s883
    %v886 = vadd.f32 %v880, %v884
    %v887 = vadd.f32 %v881, %v884
    %s888 = scalar_lea.vmem [#allocation11], 64
    %889 = vst.msk [vmem:[%s888] sm:$0xff] %vm720, %v886
    %890 = vst.msk [vmem:[%s888 + $0x8] sm:$0xff] %vm720, %v887
    %v891 = vrot.slane %v68, 5
    %s892 = vtos %v891
    %v893 = vstv %s892
    %v895 = vmul.f32 %v280, %v893
    %v896 = vmul.f32 %v281, %v893
    %897 = vrot.lane.b32.xlu0 %v891, 127
    %v898 = vpop.permute.xlu0 %897
    %s899 = vtos %v898
    %v900 = vstv %s899
    %v902 = vmul.f32 %v413, %v900
    %v903 = vmul.f32 %v414, %v900
    %v904 = vadd.f32 %v895, %v902
    %v905 = vadd.f32 %v896, %v903
    %906 = vrot.lane.b32.xlu0 %v891, 126
    %v907 = vpop.permute.xlu0 %906
    %s908 = vtos %v907
    %v909 = vstv %s908
    %v911 = vmul.f32 %v546, %v909
    %v912 = vmul.f32 %v547, %v909
    %v913 = vadd.f32 %v904, %v911
    %v914 = vadd.f32 %v905, %v912
    %915 = vrot.lane.b32.xlu0 %v891, 125
    %v916 = vpop.permute.xlu0 %915
    %s917 = vtos %v916
    %v918 = vstv %s917
    %v920 = vmul.f32 %v679, %v918
    %v921 = vmul.f32 %v680, %v918
    %v922 = vadd.f32 %v913, %v920
    %v923 = vadd.f32 %v914, %v921
    %v924 = vrot.slane %v69, 5
    %s925 = vtos %v924
    %v926 = vstv %s925
    %v928 = vadd.f32 %v922, %v926
    %v929 = vadd.f32 %v923, %v926
    %s930 = scalar_lea.vmem [#allocation11], 80
    %931 = vst.msk [vmem:[%s930] sm:$0xff] %vm720, %v928
    %932 = vst.msk [vmem:[%s930 + $0x8] sm:$0xff] %vm720, %v929
    %v933 = vrot.slane %v68, 6
    %s934 = vtos %v933
    %v935 = vstv %s934
    %v937 = vmul.f32 %v280, %v935
    %v938 = vmul.f32 %v281, %v935
    %939 = vrot.lane.b32.xlu0 %v933, 127
    %v940 = vpop.permute.xlu0 %939
    %s941 = vtos %v940
    %v942 = vstv %s941
    %v944 = vmul.f32 %v413, %v942
    %v945 = vmul.f32 %v414, %v942
    %v946 = vadd.f32 %v937, %v944
    %v947 = vadd.f32 %v938, %v945
    %948 = vrot.lane.b32.xlu0 %v933, 126
    %v949 = vpop.permute.xlu0 %948
    %s950 = vtos %v949
    %v951 = vstv %s950
    %v953 = vmul.f32 %v546, %v951
    %v954 = vmul.f32 %v547, %v951
    %v955 = vadd.f32 %v946, %v953
    %v956 = vadd.f32 %v947, %v954
    %957 = vrot.lane.b32.xlu0 %v933, 125
    %v958 = vpop.permute.xlu0 %957
    %s959 = vtos %v958
    %v960 = vstv %s959
    %v962 = vmul.f32 %v679, %v960
    %v963 = vmul.f32 %v680, %v960
    %v964 = vadd.f32 %v955, %v962
    %v965 = vadd.f32 %v956, %v963
    %v966 = vrot.slane %v69, 6
    %s967 = vtos %v966
    %v968 = vstv %s967
    %v970 = vadd.f32 %v964, %v968
    %v971 = vadd.f32 %v965, %v968
    %s972 = scalar_lea.vmem [#allocation11], 96
    %973 = vst.msk [vmem:[%s972] sm:$0xff] %vm720, %v970
    %974 = vst.msk [vmem:[%s972 + $0x8] sm:$0xff] %vm720, %v971
    %v975 = vrot.slane %v68, 7
    %s976 = vtos %v975
    %v977 = vstv %s976
    %v979 = vmul.f32 %v280, %v977
    %v980 = vmul.f32 %v281, %v977
    %981 = vrot.lane.b32.xlu0 %v975, 127
    %v982 = vpop.permute.xlu0 %981
    %s983 = vtos %v982
    %v984 = vstv %s983
    %v986 = vmul.f32 %v413, %v984
    %v987 = vmul.f32 %v414, %v984
    %v988 = vadd.f32 %v979, %v986
    %v989 = vadd.f32 %v980, %v987
    %990 = vrot.lane.b32.xlu0 %v975, 126
    %v991 = vpop.permute.xlu0 %990
    %s992 = vtos %v991
    %v993 = vstv %s992
    %v995 = vmul.f32 %v546, %v993
    %v996 = vmul.f32 %v547, %v993
    %v997 = vadd.f32 %v988, %v995
    %v998 = vadd.f32 %v989, %v996
    %999 = vrot.lane.b32.xlu0 %v975, 125
    %v1000 = vpop.permute.xlu0 %999
    %s1001 = vtos %v1000
    %v1002 = vstv %s1001
    %v1004 = vmul.f32 %v679, %v1002
    %v1005 = vmul.f32 %v680, %v1002
    %v1006 = vadd.f32 %v997, %v1004
    %v1007 = vadd.f32 %v998, %v1005
    %v1008 = vrot.slane %v69, 7
    %s1009 = vtos %v1008
    %v1010 = vstv %s1009
    %v1012 = vadd.f32 %v1006, %v1010
    %v1013 = vadd.f32 %v1007, %v1010
    %s1014 = scalar_lea.vmem [#allocation11], 112
    %1015 = vst.msk [vmem:[%s1014] sm:$0xff] %vm720, %v1012
    %1016 = vst.msk [vmem:[%s1014 + $0x8] sm:$0xff] %vm720, %v1013
    %s1017 = scalar_lea.vmem [#allocation3], 64
    %v1018 = vld [vmem:[%s1017] sm:$0xff]
    %v1019 = vld [vmem:[%s1017 + $0x8] sm:$0xff]
    %v1020 = vld [vmem:[%s1017 + $0x10] sm:$0xff]
    %v1021 = vld [vmem:[%s1017 + $0x18] sm:$0xff]
    %v1022 = vld [vmem:[%s1017 + $0x20] sm:$0xff]
    %v1023 = vld [vmem:[%s1017 + $0x28] sm:$0xff]
    %v1024 = vld [vmem:[%s1017 + $0x30] sm:$0xff]
    %v1025 = vld [vmem:[%s1017 + $0x38] sm:$0xff]
    %1034 = vrot.lane.b32.xlu0 %v1018, 1
    %v1035 = vpop.permute.xlu0 %1034
    %1036 = vrot.lane.b32.xlu0 %v1019, 1
    %v1037 = vpop.permute.xlu0 %1036
    %1038 = vrot.lane.b32.xlu0 %v1020, 1
    %v1039 = vpop.permute.xlu0 %1038
    %1040 = vrot.lane.b32.xlu0 %v1021, 1
    %v1041 = vpop.permute.xlu0 %1040
    %1042 = vrot.lane.b32.xlu0 %v1022, 1
    %v1043 = vpop.permute.xlu0 %1042
    %1044 = vrot.lane.b32.xlu0 %v1023, 1
    %v1045 = vpop.permute.xlu0 %1044
    %1046 = vrot.lane.b32.xlu0 %v1024, 1
    %v1047 = vpop.permute.xlu0 %1046
    %1048 = vrot.lane.b32.xlu0 %v1025, 1
    %v1049 = vpop.permute.xlu0 %1048
    %v1058 = vsel %vm124, 0.0, %v1035
    %v1059 = vsel %vm124, 0.0, %v1037
    %v1060 = vsel %vm124, 0.0, %v1039
    %v1061 = vsel %vm124, 0.0, %v1041
    %v1062 = vsel %vm124, 0.0, %v1043
    %v1063 = vsel %vm124, 0.0, %v1045
    %v1064 = vsel %vm124, 0.0, %v1047
    %v1065 = vsel %vm124, 0.0, %v1049
    %v1066 = vsel %vm133, %v1058, 0.0
    %v1067 = vsel %vm133, %v1059, 0.0
    %v1068 = vsel %vm133, %v1060, 0.0
    %v1069 = vsel %vm133, %v1061, 0.0
    %v1070 = vsel %vm133, %v1062, 0.0
    %v1071 = vsel %vm133, %v1063, 0.0
    %v1072 = vsel %vm133, %v1064, 0.0
    %v1073 = vsel %vm133, %v1065, 0.0
    %1074 = vst.msk [vmem:[#allocation2 + $0x1] sm:$0xff] %vm70, %v1066
    %1075 = vst.msk [vmem:[#allocation2 + $0x9] sm:$0xff] %vm70, %v1067
    %1076 = vst.msk [vmem:[#allocation2 + $0x19] sm:$0xff] %vm70, %v1068
    %1077 = vst.msk [vmem:[#allocation2 + $0x21] sm:$0xff] %vm70, %v1069
    %1078 = vst.msk [vmem:[#allocation2 + $0x31] sm:$0xff] %vm70, %v1070
    %1079 = vst.msk [vmem:[#allocation2 + $0x39] sm:$0xff] %vm70, %v1071
    %1080 = vst.msk [vmem:[#allocation2 + $0x49] sm:$0xff] %vm70, %v1072
    %1081 = vst.msk [vmem:[#allocation2 + $0x51] sm:$0xff] %vm70, %v1073
    %v1082 = vld [vmem:[#allocation2] sm:$0xff]
    %v1083 = vld [vmem:[#allocation2 + $0x8] sm:$0xff]
    %v1084 = vmul.f32 %v1082, %v154
    %v1085 = vmul.f32 %v1083, %v154
    %v1086 = vmul.f32 %v1082, %v161
    %v1087 = vmul.f32 %v1083, %v161
    %1090 = vrot.lane.b32.xlu0 %v1086, 127
    %v1091 = vpop.permute.xlu0 %1090
    %1092 = vrot.lane.b32.xlu0 %v1087, 127
    %v1093 = vpop.permute.xlu0 %1092
    %v1096 = vadd.f32 %v1084, %v1091
    %v1097 = vadd.f32 %v1085, %v1093
    %v1098 = vmul.f32 %v1082, %v178
    %v1099 = vmul.f32 %v1083, %v178
    %1102 = vrot.lane.b32.xlu0 %v1098, 126
    %v1103 = vpop.permute.xlu0 %1102
    %1104 = vrot.lane.b32.xlu0 %v1099, 126
    %v1105 = vpop.permute.xlu0 %1104
    %v1108 = vadd.f32 %v1096, %v1103
    %v1109 = vadd.f32 %v1097, %v1105
    %v1110 = vld [vmem:[#allocation2 + $0x1] sm:$0xff]
    %v1111 = vld [vmem:[#allocation2 + $0x9] sm:$0xff]
    %v1112 = vmul.f32 %v1110, %v197
    %v1113 = vmul.f32 %v1111, %v197
    %v1114 = vadd.f32 %v1108, %v1112
    %v1115 = vadd.f32 %v1109, %v1113
    %v1116 = vmul.f32 %v1110, %v206
    %v1117 = vmul.f32 %v1111, %v206
    %1120 = vrot.lane.b32.xlu0 %v1116, 127
    %v1121 = vpop.permute.xlu0 %1120
    %1122 = vrot.lane.b32.xlu0 %v1117, 127
    %v1123 = vpop.permute.xlu0 %1122
    %v1126 = vadd.f32 %v1114, %v1121
    %v1127 = vadd.f32 %v1115, %v1123
    %v1128 = vmul.f32 %v1110, %v223
    %v1129 = vmul.f32 %v1111, %v223
    %1132 = vrot.lane.b32.xlu0 %v1128, 126
    %v1133 = vpop.permute.xlu0 %1132
    %1134 = vrot.lane.b32.xlu0 %v1129, 126
    %v1135 = vpop.permute.xlu0 %1134
    %v1138 = vadd.f32 %v1126, %v1133
    %v1139 = vadd.f32 %v1127, %v1135
    %v1140 = vld [vmem:[#allocation2 + $0x2] sm:$0xff]
    %v1141 = vld [vmem:[#allocation2 + $0xa] sm:$0xff]
    %v1142 = vmul.f32 %v1140, %v242
    %v1143 = vmul.f32 %v1141, %v242
    %v1144 = vadd.f32 %v1138, %v1142
    %v1145 = vadd.f32 %v1139, %v1143
    %v1146 = vmul.f32 %v1140, %v251
    %v1147 = vmul.f32 %v1141, %v251
    %1150 = vrot.lane.b32.xlu0 %v1146, 127
    %v1151 = vpop.permute.xlu0 %1150
    %1152 = vrot.lane.b32.xlu0 %v1147, 127
    %v1153 = vpop.permute.xlu0 %1152
    %v1156 = vadd.f32 %v1144, %v1151
    %v1157 = vadd.f32 %v1145, %v1153
    %v1158 = vmul.f32 %v1140, %v268
    %v1159 = vmul.f32 %v1141, %v268
    %1162 = vrot.lane.b32.xlu0 %v1158, 126
    %v1163 = vpop.permute.xlu0 %1162
    %1164 = vrot.lane.b32.xlu0 %v1159, 126
    %v1165 = vpop.permute.xlu0 %1164
    %v1168 = vadd.f32 %v1156, %v1163
    %v1169 = vadd.f32 %v1157, %v1165
    %v1170 = vld [vmem:[%s282] sm:$0xff]
    %v1171 = vld [vmem:[%s282 + $0x8] sm:$0xff]
    %v1172 = vmul.f32 %v1170, %v287
    %v1173 = vmul.f32 %v1171, %v287
    %v1174 = vmul.f32 %v1170, %v294
    %v1175 = vmul.f32 %v1171, %v294
    %1178 = vrot.lane.b32.xlu0 %v1174, 127
    %v1179 = vpop.permute.xlu0 %1178
    %1180 = vrot.lane.b32.xlu0 %v1175, 127
    %v1181 = vpop.permute.xlu0 %1180
    %v1184 = vadd.f32 %v1172, %v1179
    %v1185 = vadd.f32 %v1173, %v1181
    %v1186 = vmul.f32 %v1170, %v311
    %v1187 = vmul.f32 %v1171, %v311
    %1190 = vrot.lane.b32.xlu0 %v1186, 126
    %v1191 = vpop.permute.xlu0 %1190
    %1192 = vrot.lane.b32.xlu0 %v1187, 126
    %v1193 = vpop.permute.xlu0 %1192
    %v1196 = vadd.f32 %v1184, %v1191
    %v1197 = vadd.f32 %v1185, %v1193
    %v1198 = vld [vmem:[%s282 + $0x1] sm:$0xff]
    %v1199 = vld [vmem:[%s282 + $0x9] sm:$0xff]
    %v1200 = vmul.f32 %v1198, %v330
    %v1201 = vmul.f32 %v1199, %v330
    %v1202 = vadd.f32 %v1196, %v1200
    %v1203 = vadd.f32 %v1197, %v1201
    %v1204 = vmul.f32 %v1198, %v339
    %v1205 = vmul.f32 %v1199, %v339
    %1208 = vrot.lane.b32.xlu0 %v1204, 127
    %v1209 = vpop.permute.xlu0 %1208
    %1210 = vrot.lane.b32.xlu0 %v1205, 127
    %v1211 = vpop.permute.xlu0 %1210
    %v1214 = vadd.f32 %v1202, %v1209
    %v1215 = vadd.f32 %v1203, %v1211
    %v1216 = vmul.f32 %v1198, %v356
    %v1217 = vmul.f32 %v1199, %v356
    %1220 = vrot.lane.b32.xlu0 %v1216, 126
    %v1221 = vpop.permute.xlu0 %1220
    %1222 = vrot.lane.b32.xlu0 %v1217, 126
    %v1223 = vpop.permute.xlu0 %1222
    %v1226 = vadd.f32 %v1214, %v1221
    %v1227 = vadd.f32 %v1215, %v1223
    %v1228 = vld [vmem:[%s282 + $0x2] sm:$0xff]
    %v1229 = vld [vmem:[%s282 + $0xa] sm:$0xff]
    %v1230 = vmul.f32 %v1228, %v375
    %v1231 = vmul.f32 %v1229, %v375
    %v1232 = vadd.f32 %v1226, %v1230
    %v1233 = vadd.f32 %v1227, %v1231
    %v1234 = vmul.f32 %v1228, %v384
    %v1235 = vmul.f32 %v1229, %v384
    %1238 = vrot.lane.b32.xlu0 %v1234, 127
    %v1239 = vpop.permute.xlu0 %1238
    %1240 = vrot.lane.b32.xlu0 %v1235, 127
    %v1241 = vpop.permute.xlu0 %1240
    %v1244 = vadd.f32 %v1232, %v1239
    %v1245 = vadd.f32 %v1233, %v1241
    %v1246 = vmul.f32 %v1228, %v401
    %v1247 = vmul.f32 %v1229, %v401
    %1250 = vrot.lane.b32.xlu0 %v1246, 126
    %v1251 = vpop.permute.xlu0 %1250
    %1252 = vrot.lane.b32.xlu0 %v1247, 126
    %v1253 = vpop.permute.xlu0 %1252
    %v1256 = vadd.f32 %v1244, %v1251
    %v1257 = vadd.f32 %v1245, %v1253
    %v1258 = vld [vmem:[%s415] sm:$0xff]
    %v1259 = vld [vmem:[%s415 + $0x8] sm:$0xff]
    %v1260 = vmul.f32 %v1258, %v420
    %v1261 = vmul.f32 %v1259, %v420
    %v1262 = vmul.f32 %v1258, %v427
    %v1263 = vmul.f32 %v1259, %v427
    %1266 = vrot.lane.b32.xlu0 %v1262, 127
    %v1267 = vpop.permute.xlu0 %1266
    %1268 = vrot.lane.b32.xlu0 %v1263, 127
    %v1269 = vpop.permute.xlu0 %1268
    %v1272 = vadd.f32 %v1260, %v1267
    %v1273 = vadd.f32 %v1261, %v1269
    %v1274 = vmul.f32 %v1258, %v444
    %v1275 = vmul.f32 %v1259, %v444
    %1278 = vrot.lane.b32.xlu0 %v1274, 126
    %v1279 = vpop.permute.xlu0 %1278
    %1280 = vrot.lane.b32.xlu0 %v1275, 126
    %v1281 = vpop.permute.xlu0 %1280
    %v1284 = vadd.f32 %v1272, %v1279
    %v1285 = vadd.f32 %v1273, %v1281
    %v1286 = vld [vmem:[%s415 + $0x1] sm:$0xff]
    %v1287 = vld [vmem:[%s415 + $0x9] sm:$0xff]
    %v1288 = vmul.f32 %v1286, %v463
    %v1289 = vmul.f32 %v1287, %v463
    %v1290 = vadd.f32 %v1284, %v1288
    %v1291 = vadd.f32 %v1285, %v1289
    %v1292 = vmul.f32 %v1286, %v472
    %v1293 = vmul.f32 %v1287, %v472
    %1296 = vrot.lane.b32.xlu0 %v1292, 127
    %v1297 = vpop.permute.xlu0 %1296
    %1298 = vrot.lane.b32.xlu0 %v1293, 127
    %v1299 = vpop.permute.xlu0 %1298
    %v1302 = vadd.f32 %v1290, %v1297
    %v1303 = vadd.f32 %v1291, %v1299
    %v1304 = vmul.f32 %v1286, %v489
    %v1305 = vmul.f32 %v1287, %v489
    %1308 = vrot.lane.b32.xlu0 %v1304, 126
    %v1309 = vpop.permute.xlu0 %1308
    %1310 = vrot.lane.b32.xlu0 %v1305, 126
    %v1311 = vpop.permute.xlu0 %1310
    %v1314 = vadd.f32 %v1302, %v1309
    %v1315 = vadd.f32 %v1303, %v1311
    %v1316 = vld [vmem:[%s415 + $0x2] sm:$0xff]
    %v1317 = vld [vmem:[%s415 + $0xa] sm:$0xff]
    %v1318 = vmul.f32 %v1316, %v508
    %v1319 = vmul.f32 %v1317, %v508
    %v1320 = vadd.f32 %v1314, %v1318
    %v1321 = vadd.f32 %v1315, %v1319
    %v1322 = vmul.f32 %v1316, %v517
    %v1323 = vmul.f32 %v1317, %v517
    %1326 = vrot.lane.b32.xlu0 %v1322, 127
    %v1327 = vpop.permute.xlu0 %1326
    %1328 = vrot.lane.b32.xlu0 %v1323, 127
    %v1329 = vpop.permute.xlu0 %1328
    %v1332 = vadd.f32 %v1320, %v1327
    %v1333 = vadd.f32 %v1321, %v1329
    %v1334 = vmul.f32 %v1316, %v534
    %v1335 = vmul.f32 %v1317, %v534
    %1338 = vrot.lane.b32.xlu0 %v1334, 126
    %v1339 = vpop.permute.xlu0 %1338
    %1340 = vrot.lane.b32.xlu0 %v1335, 126
    %v1341 = vpop.permute.xlu0 %1340
    %v1344 = vadd.f32 %v1332, %v1339
    %v1345 = vadd.f32 %v1333, %v1341
    %v1346 = vld [vmem:[%s548] sm:$0xff]
    %v1347 = vld [vmem:[%s548 + $0x8] sm:$0xff]
    %v1348 = vmul.f32 %v1346, %v553
    %v1349 = vmul.f32 %v1347, %v553
    %v1350 = vmul.f32 %v1346, %v560
    %v1351 = vmul.f32 %v1347, %v560
    %1354 = vrot.lane.b32.xlu0 %v1350, 127
    %v1355 = vpop.permute.xlu0 %1354
    %1356 = vrot.lane.b32.xlu0 %v1351, 127
    %v1357 = vpop.permute.xlu0 %1356
    %v1360 = vadd.f32 %v1348, %v1355
    %v1361 = vadd.f32 %v1349, %v1357
    %v1362 = vmul.f32 %v1346, %v577
    %v1363 = vmul.f32 %v1347, %v577
    %1366 = vrot.lane.b32.xlu0 %v1362, 126
    %v1367 = vpop.permute.xlu0 %1366
    %1368 = vrot.lane.b32.xlu0 %v1363, 126
    %v1369 = vpop.permute.xlu0 %1368
    %v1372 = vadd.f32 %v1360, %v1367
    %v1373 = vadd.f32 %v1361, %v1369
    %v1374 = vld [vmem:[%s548 + $0x1] sm:$0xff]
    %v1375 = vld [vmem:[%s548 + $0x9] sm:$0xff]
    %v1376 = vmul.f32 %v1374, %v596
    %v1377 = vmul.f32 %v1375, %v596
    %v1378 = vadd.f32 %v1372, %v1376
    %v1379 = vadd.f32 %v1373, %v1377
    %v1380 = vmul.f32 %v1374, %v605
    %v1381 = vmul.f32 %v1375, %v605
    %1384 = vrot.lane.b32.xlu0 %v1380, 127
    %v1385 = vpop.permute.xlu0 %1384
    %1386 = vrot.lane.b32.xlu0 %v1381, 127
    %v1387 = vpop.permute.xlu0 %1386
    %v1390 = vadd.f32 %v1378, %v1385
    %v1391 = vadd.f32 %v1379, %v1387
    %v1392 = vmul.f32 %v1374, %v622
    %v1393 = vmul.f32 %v1375, %v622
    %1396 = vrot.lane.b32.xlu0 %v1392, 126
    %v1397 = vpop.permute.xlu0 %1396
    %1398 = vrot.lane.b32.xlu0 %v1393, 126
    %v1399 = vpop.permute.xlu0 %1398
    %v1402 = vadd.f32 %v1390, %v1397
    %v1403 = vadd.f32 %v1391, %v1399
    %v1404 = vld [vmem:[%s548 + $0x2] sm:$0xff]
    %v1405 = vld [vmem:[%s548 + $0xa] sm:$0xff]
    %v1406 = vmul.f32 %v1404, %v641
    %v1407 = vmul.f32 %v1405, %v641
    %v1408 = vadd.f32 %v1402, %v1406
    %v1409 = vadd.f32 %v1403, %v1407
    %v1410 = vmul.f32 %v1404, %v650
    %v1411 = vmul.f32 %v1405, %v650
    %1414 = vrot.lane.b32.xlu0 %v1410, 127
    %v1415 = vpop.permute.xlu0 %1414
    %1416 = vrot.lane.b32.xlu0 %v1411, 127
    %v1417 = vpop.permute.xlu0 %1416
    %v1420 = vadd.f32 %v1408, %v1415
    %v1421 = vadd.f32 %v1409, %v1417
    %v1422 = vmul.f32 %v1404, %v667
    %v1423 = vmul.f32 %v1405, %v667
    %1426 = vrot.lane.b32.xlu0 %v1422, 126
    %v1427 = vpop.permute.xlu0 %1426
    %1428 = vrot.lane.b32.xlu0 %v1423, 126
    %v1429 = vpop.permute.xlu0 %1428
    %v1432 = vadd.f32 %v1420, %v1427
    %v1433 = vadd.f32 %v1421, %v1429
    %v1434 = vmul.f32 %v1168, %v683
    %v1435 = vmul.f32 %v1169, %v683
    %v1436 = vmul.f32 %v1256, %v690
    %v1437 = vmul.f32 %v1257, %v690
    %v1438 = vadd.f32 %v1434, %v1436
    %v1439 = vadd.f32 %v1435, %v1437
    %v1440 = vmul.f32 %v1344, %v699
    %v1441 = vmul.f32 %v1345, %v699
    %v1442 = vadd.f32 %v1438, %v1440
    %v1443 = vadd.f32 %v1439, %v1441
    %v1444 = vmul.f32 %v1432, %v708
    %v1445 = vmul.f32 %v1433, %v708
    %v1446 = vadd.f32 %v1442, %v1444
    %v1447 = vadd.f32 %v1443, %v1445
    %v1448 = vadd.f32 %v1446, %v716
    %v1449 = vadd.f32 %v1447, %v716
    %s1450 = scalar_lea.vmem [#allocation11], 128
    %1451 = vst.msk [vmem:[%s1450] sm:$0xff] %vm720, %v1448
    %1452 = vst.msk [vmem:[%s1450 + $0x8] sm:$0xff] %vm720, %v1449
    %v1453 = vmul.f32 %v1168, %v725
    %v1454 = vmul.f32 %v1169, %v725
    %v1455 = vmul.f32 %v1256, %v732
    %v1456 = vmul.f32 %v1257, %v732
    %v1457 = vadd.f32 %v1453, %v1455
    %v1458 = vadd.f32 %v1454, %v1456
    %v1459 = vmul.f32 %v1344, %v741
    %v1460 = vmul.f32 %v1345, %v741
    %v1461 = vadd.f32 %v1457, %v1459
    %v1462 = vadd.f32 %v1458, %v1460
    %v1463 = vmul.f32 %v1432, %v750
    %v1464 = vmul.f32 %v1433, %v750
    %v1465 = vadd.f32 %v1461, %v1463
    %v1466 = vadd.f32 %v1462, %v1464
    %v1467 = vadd.f32 %v1465, %v758
    %v1468 = vadd.f32 %v1466, %v758
    %s1469 = scalar_lea.vmem [#allocation11], 144
    %1470 = vst.msk [vmem:[%s1469] sm:$0xff] %vm720, %v1467
    %1471 = vst.msk [vmem:[%s1469 + $0x8] sm:$0xff] %vm720, %v1468
    %v1472 = vmul.f32 %v1168, %v767
    %v1473 = vmul.f32 %v1169, %v767
    %v1474 = vmul.f32 %v1256, %v774
    %v1475 = vmul.f32 %v1257, %v774
    %v1476 = vadd.f32 %v1472, %v1474
    %v1477 = vadd.f32 %v1473, %v1475
    %v1478 = vmul.f32 %v1344, %v783
    %v1479 = vmul.f32 %v1345, %v783
    %v1480 = vadd.f32 %v1476, %v1478
    %v1481 = vadd.f32 %v1477, %v1479
    %v1482 = vmul.f32 %v1432, %v792
    %v1483 = vmul.f32 %v1433, %v792
    %v1484 = vadd.f32 %v1480, %v1482
    %v1485 = vadd.f32 %v1481, %v1483
    %v1486 = vadd.f32 %v1484, %v800
    %v1487 = vadd.f32 %v1485, %v800
    %s1488 = scalar_lea.vmem [#allocation11], 160
    %1489 = vst.msk [vmem:[%s1488] sm:$0xff] %vm720, %v1486
    %1490 = vst.msk [vmem:[%s1488 + $0x8] sm:$0xff] %vm720, %v1487
    %v1491 = vmul.f32 %v1168, %v809
    %v1492 = vmul.f32 %v1169, %v809
    %v1493 = vmul.f32 %v1256, %v816
    %v1494 = vmul.f32 %v1257, %v816
    %v1495 = vadd.f32 %v1491, %v1493
    %v1496 = vadd.f32 %v1492, %v1494
    %v1497 = vmul.f32 %v1344, %v825
    %v1498 = vmul.f32 %v1345, %v825
    %v1499 = vadd.f32 %v1495, %v1497
    %v1500 = vadd.f32 %v1496, %v1498
    %v1501 = vmul.f32 %v1432, %v834
    %v1502 = vmul.f32 %v1433, %v834
    %v1503 = vadd.f32 %v1499, %v1501
    %v1504 = vadd.f32 %v1500, %v1502
    %v1505 = vadd.f32 %v1503, %v842
    %v1506 = vadd.f32 %v1504, %v842
    %s1507 = scalar_lea.vmem [#allocation11], 176
    %1508 = vst.msk [vmem:[%s1507] sm:$0xff] %vm720, %v1505
    %1509 = vst.msk [vmem:[%s1507 + $0x8] sm:$0xff] %vm720, %v1506
    %v1510 = vmul.f32 %v1168, %v851
    %v1511 = vmul.f32 %v1169, %v851
    %v1512 = vmul.f32 %v1256, %v858
    %v1513 = vmul.f32 %v1257, %v858
    %v1514 = vadd.f32 %v1510, %v1512
    %v1515 = vadd.f32 %v1511, %v1513
    %v1516 = vmul.f32 %v1344, %v867
    %v1517 = vmul.f32 %v1345, %v867
    %v1518 = vadd.f32 %v1514, %v1516
    %v1519 = vadd.f32 %v1515, %v1517
    %v1520 = vmul.f32 %v1432, %v876
    %v1521 = vmul.f32 %v1433, %v876
    %v1522 = vadd.f32 %v1518, %v1520
    %v1523 = vadd.f32 %v1519, %v1521
    %v1524 = vadd.f32 %v1522, %v884
    %v1525 = vadd.f32 %v1523, %v884
    %s1526 = scalar_lea.vmem [#allocation11], 192
    %1527 = vst.msk [vmem:[%s1526] sm:$0xff] %vm720, %v1524
    %1528 = vst.msk [vmem:[%s1526 + $0x8] sm:$0xff] %vm720, %v1525
    %v1529 = vmul.f32 %v1168, %v893
    %v1530 = vmul.f32 %v1169, %v893
    %v1531 = vmul.f32 %v1256, %v900
    %v1532 = vmul.f32 %v1257, %v900
    %v1533 = vadd.f32 %v1529, %v1531
    %v1534 = vadd.f32 %v1530, %v1532
    %v1535 = vmul.f32 %v1344, %v909
    %v1536 = vmul.f32 %v1345, %v909
    %v1537 = vadd.f32 %v1533, %v1535
    %v1538 = vadd.f32 %v1534, %v1536
    %v1539 = vmul.f32 %v1432, %v918
    %v1540 = vmul.f32 %v1433, %v918
    %v1541 = vadd.f32 %v1537, %v1539
    %v1542 = vadd.f32 %v1538, %v1540
    %v1543 = vadd.f32 %v1541, %v926
    %v1544 = vadd.f32 %v1542, %v926
    %s1545 = scalar_lea.vmem [#allocation11], 208
    %1546 = vst.msk [vmem:[%s1545] sm:$0xff] %vm720, %v1543
    %1547 = vst.msk [vmem:[%s1545 + $0x8] sm:$0xff] %vm720, %v1544
    %v1548 = vmul.f32 %v1168, %v935
    %v1549 = vmul.f32 %v1169, %v935
    %v1550 = vmul.f32 %v1256, %v942
    %v1551 = vmul.f32 %v1257, %v942
    %v1552 = vadd.f32 %v1548, %v1550
    %v1553 = vadd.f32 %v1549, %v1551
    %v1554 = vmul.f32 %v1344, %v951
    %v1555 = vmul.f32 %v1345, %v951
    %v1556 = vadd.f32 %v1552, %v1554
    %v1557 = vadd.f32 %v1553, %v1555
    %v1558 = vmul.f32 %v1432, %v960
    %v1559 = vmul.f32 %v1433, %v960
    %v1560 = vadd.f32 %v1556, %v1558
    %v1561 = vadd.f32 %v1557, %v1559
    %v1562 = vadd.f32 %v1560, %v968
    %v1563 = vadd.f32 %v1561, %v968
    %s1564 = scalar_lea.vmem [#allocation11], 224
    %1565 = vst.msk [vmem:[%s1564] sm:$0xff] %vm720, %v1562
    %1566 = vst.msk [vmem:[%s1564 + $0x8] sm:$0xff] %vm720, %v1563
    %v1567 = vmul.f32 %v1168, %v977
    %v1568 = vmul.f32 %v1169, %v977
    %v1569 = vmul.f32 %v1256, %v984
    %v1570 = vmul.f32 %v1257, %v984
    %v1571 = vadd.f32 %v1567, %v1569
    %v1572 = vadd.f32 %v1568, %v1570
    %v1573 = vmul.f32 %v1344, %v993
    %v1574 = vmul.f32 %v1345, %v993
    %v1575 = vadd.f32 %v1571, %v1573
    %v1576 = vadd.f32 %v1572, %v1574
    %v1577 = vmul.f32 %v1432, %v1002
    %v1578 = vmul.f32 %v1433, %v1002
    %v1579 = vadd.f32 %v1575, %v1577
    %v1580 = vadd.f32 %v1576, %v1578
    %v1581 = vadd.f32 %v1579, %v1010
    %v1582 = vadd.f32 %v1580, %v1010
    %s1583 = scalar_lea.vmem [#allocation11], 240
    %1584 = vst.msk [vmem:[%s1583] sm:$0xff] %vm720, %v1581
    %1585 = vst.msk [vmem:[%s1583 + $0x8] sm:$0xff] %vm720, %v1582
    // Predicated region
    $region34: #{tpu_custom_call.1} parent=1 // pred_check
      _
    $region35: #{tpu_custom_call.1} parent=1 // pred_check_branch
      %1587 = sbr.rel (0) target = $region37
    $region36: #{tpu_custom_call.1} parent=1 // pred_region
      %s1589 = ssub.s32 4096, 4096
      %1590 = vsyncadd [#allocation5], %s1589
      %s1591 = sshll.u32 [#allocation11], 4
      %s1592 = int_to_ptr.vmem [resolvable:$true] %s1591
      %1597 = dma.vmem_to_hbm [thread:$0]  %s1592, 4096, %s4, [#allocation5], 128, 128, 8
    $region37: #{tpu_custom_call.1} parent=1 // pred_fallthru
      _
    // Predicated region
    $region38: #{tpu_custom_call.1} parent=1 // pred_check
      _
    $region39: #{tpu_custom_call.1} parent=1 // pred_check_branch
      %1599 = sbr.rel (0) target = $region41
    $region40: #{tpu_custom_call.1} parent=1 // pred_region
      %1600 = dma.done [#allocation5], 4096
    $region41: #{tpu_custom_call.1} parent=1 // pred_fallthru
      _
    %1601 = vsyncpa [#allocation4], 1
    %1602 = vsyncpa [#allocation7], 1
    %1603 = vsyncpa [#allocation10], 1
    %1604 = vsyncpa [#allocation5], 1

</llo_original>
